<compile_context>
chip_gen: v7x
topology: tpu7x:2x2x1
jax: 0.10.0
libtpu: 0.0.40
codegen_flags: <defaults>
</compile_context>

<pallas_src>
import jax
import jax.numpy as jnp
from jax.experimental import pallas as pl
from jax.experimental.pallas import tpu as pltpu

INPUT_DIM = 150          # ANN(input_dim=150)
HIDDEN_DIM = 150         # ANN(hidden_dim=150)
PAD_DIM = 256            # pad feature dims to a lane-friendly multiple of 128
NUM_LAYERS = 6
MAX_BATCH_TILE = 512     # large-batch tile (amortize per-step overhead, VMEM-safe)
SMALL_BATCH_MAX = 128    # <= this -> single-step weight-streaming kernel
BIAS_ROWS = 8            # NUM_LAYERS rounded up to 8 sublanes


def _round_up(n, m):
    return ((n + m - 1) // m) * m


def _cdiv(a, b):
    return -(-a // b)


def _pad2d(x, rows, cols):
    r, c = x.shape
    return jnp.pad(x, ((0, rows - r), (0, cols - c)))


def _layer_stack(h, w_get, b_ref):
    """Shared 6-layer MLP math: 5x (Linear+ReLU) then Linear.

    h: (BT, 256) f32.  w_get(l) -> (256, 256) bf16 weight for layer l.
    b_ref: (8, 256) f32 VMEM ref; row l read as a (1,256) slab (VPU broadcast,
    no sublane extract/relayout).  Activations stay f32; MXU operands are bf16
    with f32 accumulation.
    """
    for l in range(NUM_LAYERS):
        h = jnp.dot(h.astype(jnp.bfloat16), w_get(l),
                    preferred_element_type=jnp.float32)
        h = h + b_ref[pl.ds(l, 1), :]
        if l < NUM_LAYERS - 1:
            h = jnp.maximum(h, 0.0)       # ReLU; Dropout is identity at inference
    return h


def _mlp_resident_kernel(x_ref, w_ref, b_ref, o_ref):
    """Large-batch path: weights resident in VMEM via constant index_maps.

    x_ref: (BT, 256)  w_ref: (6, 256, 256) bf16  b_ref: (8, 256)  o_ref: (BT, 256)
    """
    o_ref[...] = _layer_stack(x_ref[...], lambda l: w_ref[l], b_ref).astype(o_ref.dtype)


def _mlp_streaming_kernel(x_ref, b_ref, w_hbm, o_ref, w_vmem, sems):
    """Small-batch path (grid=1): stream per-layer weights HBM->VMEM.

    All 6 layer DMAs are issued up front; each is waited on right before its
    matmul, so layer l's fetch overlaps layer l-1's compute.
    x_ref: (BT, 256)  b_ref: (8, 256)  w_hbm: (6, 256, 256) bf16 in HBM (pl.ANY)
    w_vmem: (6, 256, 256) bf16 scratch  sems: 6 DMA semaphores
    """
    for l in range(NUM_LAYERS):
        pltpu.make_async_copy(w_hbm.at[l], w_vmem.at[l], sems.at[l]).start()

    def w_get(l):
        pltpu.make_async_copy(w_hbm.at[l], w_vmem.at[l], sems.at[l]).wait()
        return w_vmem[l]

    o_ref[...] = _layer_stack(x_ref[...], w_get, b_ref).astype(o_ref.dtype)


def pack_params(params):
    """One-time packing (at model load, NOT per forward call).

    params: list of 6 PyTorch-style (W, b) pairs, W: (out, in), b: (out,).
    Returns (w_stack (6,256,256) bf16, b_pack (8,256) f32).  Zero padding keeps
    padded lanes exactly zero through every Linear(+ReLU), in bf16 too.
    """
    w_stack = jnp.stack(
        [_pad2d(w.T, PAD_DIM, PAD_DIM) for (w, _) in params]).astype(jnp.bfloat16)
    b_pack = jnp.stack(
        [jnp.pad(b, (0, PAD_DIM - b.shape[0])) for (_, b) in params]).astype(jnp.float32)
    b_pack = jnp.pad(b_pack, ((0, BIAS_ROWS - NUM_LAYERS), (0, 0)))   # (8, 256)
    return w_stack, b_pack


def ann_forward(x, packed_params):
    """x: (batch, INPUT_DIM) float32.  packed_params: output of pack_params()."""
    w_stack, b_pack = packed_params
    batch = x.shape[0]

    if batch <= SMALL_BATCH_MAX:
        # --- latency path: one grid step, per-layer weight streaming ---
        batch_tile = _round_up(batch, 8)
        batch_pad = batch_tile
        x_p = _pad2d(x, batch_pad, PAD_DIM)
        act_spec = pl.BlockSpec((batch_tile, PAD_DIM), lambda i: (i, 0))
        out = pl.pallas_call(
            _mlp_streaming_kernel,
            out_shape=jax.ShapeDtypeStruct((batch_pad, PAD_DIM), jnp.float32),
            grid_spec=pltpu.PrefetchScalarGridSpec(
                num_scalar_prefetch=0,
                grid=(1,),
                in_specs=[act_spec,
                          pl.BlockSpec((BIAS_ROWS, PAD_DIM), lambda i: (0, 0)),
                          pl.BlockSpec(memory_space=pl.ANY)],
                out_specs=act_spec,
                scratch_shapes=[
                    pltpu.VMEM((NUM_LAYERS, PAD_DIM, PAD_DIM), jnp.bfloat16),
                    pltpu.SemaphoreType.DMA((NUM_LAYERS,)),
                ]),
            compiler_params=pltpu.CompilerParams(
                dimension_semantics=("arbitrary",)),
        )(x_p, b_pack, w_stack)
    else:
        # --- throughput path: resident weights, multi-step parallel grid ---
        # Tile sized so the grid has >=2 steps (v7x: both TensorCores busy),
        # capped at 512 rows (well under scoped VMEM on all generations).
        batch_tile = min(MAX_BATCH_TILE, _round_up(_cdiv(batch, 2), 8))
        batch_pad = _round_up(batch, batch_tile)
        x_p = _pad2d(x, batch_pad, PAD_DIM)
        act_spec = pl.BlockSpec((batch_tile, PAD_DIM), lambda i: (i, 0))
        # Constant index_maps -> weights/bias DMA'd once, resident across grid.
        w_spec = pl.BlockSpec((NUM_LAYERS, PAD_DIM, PAD_DIM), lambda i: (0, 0, 0))
        b_spec = pl.BlockSpec((BIAS_ROWS, PAD_DIM), lambda i: (0, 0))
        out = pl.pallas_call(
            _mlp_resident_kernel,
            out_shape=jax.ShapeDtypeStruct((batch_pad, PAD_DIM), jnp.float32),
            grid_spec=pltpu.PrefetchScalarGridSpec(
                num_scalar_prefetch=0,
                grid=(batch_pad // batch_tile,),
                in_specs=[act_spec, w_spec, b_spec],
                out_specs=act_spec,
            ),
            compiler_params=pltpu.CompilerParams(
                dimension_semantics=("parallel",)),
        )(x_p, w_stack, b_pack)

    # Downstream consumers that tolerate the 256-lane padded layout can skip
    # this slice (saves one extra memory pass + dispatch); kept here to
    # preserve the module's (batch, 150) output contract.
    return out[:batch, :INPUT_DIM]


def init_params(key):
    """Deterministic PyTorch-style init: U(-1/sqrt(fan_in), 1/sqrt(fan_in))."""
    dims = [(INPUT_DIM, HIDDEN_DIM)] + [(HIDDEN_DIM, HIDDEN_DIM)] * 4 \
           + [(HIDDEN_DIM, INPUT_DIM)]
    params = []
    for (fan_in, fan_out) in dims:
        key, kw, kb = jax.random.split(key, 3)
        bound = 1.0 / (fan_in ** 0.5)
        w = jax.random.uniform(kw, (fan_out, fan_in), jnp.float32, -bound, bound)
        b = jax.random.uniform(kb, (fan_out,), jnp.float32, -bound, bound)
        params.append((w, b))
    return params


def reference_forward(x, params):
    """Exact f32 reference (PyTorch semantics, Dropout in eval mode)."""
    h = x
    for i, (w, b) in enumerate(params):
        h = h @ w.T + b
        if i < len(params) - 1:
            h = jnp.maximum(h, 0.0)
    return h


def reference_forward_bf16(x, params):
    """Numerics-matched reference: bf16 operands, f32 accumulation (as kernel)."""
    h = x.astype(jnp.float32)
    for i, (w, b) in enumerate(params):
        h = jnp.dot(h.astype(jnp.bfloat16), w.T.astype(jnp.bfloat16),
                    preferred_element_type=jnp.float32) + b
        if i < len(params) - 1:
            h = jnp.maximum(h, 0.0)
    return h


if __name__ == "__main__":
    key = jax.random.PRNGKey(0)
    key, kx_small, kx_large = jax.random.split(key, 3)
    params = init_params(key)

    # Pack (transpose + pad + bf16 cast) the weights ONCE, outside the forward path.
    packed = jax.tree_util.tree_map(jax.device_put, pack_params(params))

    # Small batch -> single-step streaming kernel (per-layer weight DMA overlap).
    batch_small = 4
    x_small = jax.random.normal(kx_small, (batch_small, INPUT_DIM), jnp.float32)
    y_small = ann_forward(x_small, packed)
    jax.block_until_ready(y_small)
    assert y_small.shape == (batch_small, INPUT_DIM)
    assert jnp.allclose(y_small, reference_forward_bf16(x_small, params),
                        atol=5e-3, rtol=5e-3)
    assert jnp.allclose(y_small, reference_forward(x_small, params),
                        atol=0.25, rtol=0.05)

    # Larger, non-multiple batch -> resident-weight kernel, 2-step parallel grid.
    batch_large = 200
    x_large = jax.random.normal(kx_large, (batch_large, INPUT_DIM), jnp.float32)
    y_large = ann_forward(x_large, packed)
    jax.block_until_ready(y_large)
    assert y_large.shape == (batch_large, INPUT_DIM)
    assert jnp.allclose(y_large, reference_forward_bf16(x_large, params),
                        atol=5e-3, rtol=5e-3)
    assert jnp.allclose(y_large, reference_forward(x_large, params),
                        atol=0.25, rtol=0.05)

    print("KERNEL_OK")
</pallas_src>

<mosaic_0001>
module attributes {stable_mosaic.version = 11 : i64} {
  func.func @_mlp_streaming_kernel(%arg0: i32, %arg1: memref<8x256xf32, #tpu.memory_space<vmem>>, %arg2: memref<8x256xf32, #tpu.memory_space<vmem>>, %arg3: memref<6x256x256xbf16, #tpu.memory_space<any>>, %arg4: memref<8x256xf32, #tpu.memory_space<vmem>>, %arg5: memref<6x256x256xbf16, #tpu.memory_space<vmem>>, %arg6: memref<6x!tpu.dma_semaphore, #tpu.memory_space<semaphore_mem>>) attributes {dimension_semantics = [#tpu.dimension_semantics<arbitrary>], iteration_bounds = array<i64: 1>, scalar_prefetch = 0 : i64, scratch_operands = 2 : i64, tpu.core_type = #tpu.core_type<tc>, window_params = [{transform_indices = @transform_0, window_bounds = array<i64: 8, 256>}, {pipeline_mode = #tpu.pipeline_mode<synchronous>, transform_indices = @transform_1, window_bounds = array<i64: 8, 256>}, {}, {transform_indices = @transform_3, window_bounds = array<i64: 8, 256>}]} {
    %c0_i32 = arith.constant 0 : i32
    %c0_i32_0 = arith.constant 0 : i32
    %c0_i32_1 = arith.constant 0 : i32
    %c0_i32_2 = arith.constant 0 : i32
    %c0_i32_3 = arith.constant 0 : i32
    %0 = tpu.memref_slice %arg3[%c0_i32, %c0_i32_2, %c0_i32_3] : memref<6x256x256xbf16, #tpu.memory_space<any>> -> memref<1x256x256xbf16, #tpu.memory_space<any>>
    %1 = tpu.memref_squeeze %0 : memref<1x256x256xbf16, #tpu.memory_space<any>> -> memref<256x256xbf16, #tpu.memory_space<any>>
    %c0_i32_4 = arith.constant 0 : i32
    %c0_i32_5 = arith.constant 0 : i32
    %2 = tpu.memref_slice %arg5[%c0_i32_0, %c0_i32_4, %c0_i32_5] : memref<6x256x256xbf16, #tpu.memory_space<vmem>> -> memref<1x256x256xbf16, #tpu.memory_space<vmem>>
    %3 = tpu.memref_squeeze %2 : memref<1x256x256xbf16, #tpu.memory_space<vmem>> -> memref<256x256xbf16, #tpu.memory_space<vmem>>
    %4 = tpu.memref_slice %arg6[%c0_i32_1] : memref<6x!tpu.dma_semaphore, #tpu.memory_space<semaphore_mem>> -> memref<1x!tpu.dma_semaphore, #tpu.memory_space<semaphore_mem>>
    %5 = tpu.memref_squeeze %4 : memref<1x!tpu.dma_semaphore, #tpu.memory_space<semaphore_mem>> -> memref<!tpu.dma_semaphore, #tpu.memory_space<semaphore_mem>>
    tpu.enqueue_dma source(%1 : memref<256x256xbf16, #tpu.memory_space<any>>) target(%3 : memref<256x256xbf16, #tpu.memory_space<vmem>>) target_semaphore(%5 : memref<!tpu.dma_semaphore, #tpu.memory_space<semaphore_mem>>)
    %c1_i32 = arith.constant 1 : i32
    %c1_i32_6 = arith.constant 1 : i32
    %c1_i32_7 = arith.constant 1 : i32
    %c0_i32_8 = arith.constant 0 : i32
    %c0_i32_9 = arith.constant 0 : i32
    %6 = tpu.memref_slice %arg3[%c1_i32, %c0_i32_8, %c0_i32_9] : memref<6x256x256xbf16, #tpu.memory_space<any>> -> memref<1x256x256xbf16, #tpu.memory_space<any>>
    %7 = tpu.memref_squeeze %6 : memref<1x256x256xbf16, #tpu.memory_space<any>> -> memref<256x256xbf16, #tpu.memory_space<any>>
    %c0_i32_10 = arith.constant 0 : i32
    %c0_i32_11 = arith.constant 0 : i32
    %8 = tpu.memref_slice %arg5[%c1_i32_6, %c0_i32_10, %c0_i32_11] : memref<6x256x256xbf16, #tpu.memory_space<vmem>> -> memref<1x256x256xbf16, #tpu.memory_space<vmem>>
    %9 = tpu.memref_squeeze %8 : memref<1x256x256xbf16, #tpu.memory_space<vmem>> -> memref<256x256xbf16, #tpu.memory_space<vmem>>
    %10 = tpu.memref_slice %arg6[%c1_i32_7] : memref<6x!tpu.dma_semaphore, #tpu.memory_space<semaphore_mem>> -> memref<1x!tpu.dma_semaphore, #tpu.memory_space<semaphore_mem>>
    %11 = tpu.memref_squeeze %10 : memref<1x!tpu.dma_semaphore, #tpu.memory_space<semaphore_mem>> -> memref<!tpu.dma_semaphore, #tpu.memory_space<semaphore_mem>>
    tpu.enqueue_dma source(%7 : memref<256x256xbf16, #tpu.memory_space<any>>) target(%9 : memref<256x256xbf16, #tpu.memory_space<vmem>>) target_semaphore(%11 : memref<!tpu.dma_semaphore, #tpu.memory_space<semaphore_mem>>)
    %c2_i32 = arith.constant 2 : i32
    %c2_i32_12 = arith.constant 2 : i32
    %c2_i32_13 = arith.constant 2 : i32
    %c0_i32_14 = arith.constant 0 : i32
    %c0_i32_15 = arith.constant 0 : i32
    %12 = tpu.memref_slice %arg3[%c2_i32, %c0_i32_14, %c0_i32_15] : memref<6x256x256xbf16, #tpu.memory_space<any>> -> memref<1x256x256xbf16, #tpu.memory_space<any>>
    %13 = tpu.memref_squeeze %12 : memref<1x256x256xbf16, #tpu.memory_space<any>> -> memref<256x256xbf16, #tpu.memory_space<any>>
    %c0_i32_16 = arith.constant 0 : i32
    %c0_i32_17 = arith.constant 0 : i32
    %14 = tpu.memref_slice %arg5[%c2_i32_12, %c0_i32_16, %c0_i32_17] : memref<6x256x256xbf16, #tpu.memory_space<vmem>> -> memref<1x256x256xbf16, #tpu.memory_space<vmem>>
    %15 = tpu.memref_squeeze %14 : memref<1x256x256xbf16, #tpu.memory_space<vmem>> -> memref<256x256xbf16, #tpu.memory_space<vmem>>
    %16 = tpu.memref_slice %arg6[%c2_i32_13] : memref<6x!tpu.dma_semaphore, #tpu.memory_space<semaphore_mem>> -> memref<1x!tpu.dma_semaphore, #tpu.memory_space<semaphore_mem>>
    %17 = tpu.memref_squeeze %16 : memref<1x!tpu.dma_semaphore, #tpu.memory_space<semaphore_mem>> -> memref<!tpu.dma_semaphore, #tpu.memory_space<semaphore_mem>>
    tpu.enqueue_dma source(%13 : memref<256x256xbf16, #tpu.memory_space<any>>) target(%15 : memref<256x256xbf16, #tpu.memory_space<vmem>>) target_semaphore(%17 : memref<!tpu.dma_semaphore, #tpu.memory_space<semaphore_mem>>)
    %c3_i32 = arith.constant 3 : i32
    %c3_i32_18 = arith.constant 3 : i32
    %c3_i32_19 = arith.constant 3 : i32
    %c0_i32_20 = arith.constant 0 : i32
    %c0_i32_21 = arith.constant 0 : i32
    %18 = tpu.memref_slice %arg3[%c3_i32, %c0_i32_20, %c0_i32_21] : memref<6x256x256xbf16, #tpu.memory_space<any>> -> memref<1x256x256xbf16, #tpu.memory_space<any>>
    %19 = tpu.memref_squeeze %18 : memref<1x256x256xbf16, #tpu.memory_space<any>> -> memref<256x256xbf16, #tpu.memory_space<any>>
    %c0_i32_22 = arith.constant 0 : i32
    %c0_i32_23 = arith.constant 0 : i32
    %20 = tpu.memref_slice %arg5[%c3_i32_18, %c0_i32_22, %c0_i32_23] : memref<6x256x256xbf16, #tpu.memory_space<vmem>> -> memref<1x256x256xbf16, #tpu.memory_space<vmem>>
    %21 = tpu.memref_squeeze %20 : memref<1x256x256xbf16, #tpu.memory_space<vmem>> -> memref<256x256xbf16, #tpu.memory_space<vmem>>
    %22 = tpu.memref_slice %arg6[%c3_i32_19] : memref<6x!tpu.dma_semaphore, #tpu.memory_space<semaphore_mem>> -> memref<1x!tpu.dma_semaphore, #tpu.memory_space<semaphore_mem>>
    %23 = tpu.memref_squeeze %22 : memref<1x!tpu.dma_semaphore, #tpu.memory_space<semaphore_mem>> -> memref<!tpu.dma_semaphore, #tpu.memory_space<semaphore_mem>>
    tpu.enqueue_dma source(%19 : memref<256x256xbf16, #tpu.memory_space<any>>) target(%21 : memref<256x256xbf16, #tpu.memory_space<vmem>>) target_semaphore(%23 : memref<!tpu.dma_semaphore, #tpu.memory_space<semaphore_mem>>)
    %c4_i32 = arith.constant 4 : i32
    %c4_i32_24 = arith.constant 4 : i32
    %c4_i32_25 = arith.constant 4 : i32
    %c0_i32_26 = arith.constant 0 : i32
    %c0_i32_27 = arith.constant 0 : i32
    %24 = tpu.memref_slice %arg3[%c4_i32, %c0_i32_26, %c0_i32_27] : memref<6x256x256xbf16, #tpu.memory_space<any>> -> memref<1x256x256xbf16, #tpu.memory_space<any>>
    %25 = tpu.memref_squeeze %24 : memref<1x256x256xbf16, #tpu.memory_space<any>> -> memref<256x256xbf16, #tpu.memory_space<any>>
    %c0_i32_28 = arith.constant 0 : i32
    %c0_i32_29 = arith.constant 0 : i32
    %26 = tpu.memref_slice %arg5[%c4_i32_24, %c0_i32_28, %c0_i32_29] : memref<6x256x256xbf16, #tpu.memory_space<vmem>> -> memref<1x256x256xbf16, #tpu.memory_space<vmem>>
    %27 = tpu.memref_squeeze %26 : memref<1x256x256xbf16, #tpu.memory_space<vmem>> -> memref<256x256xbf16, #tpu.memory_space<vmem>>
    %28 = tpu.memref_slice %arg6[%c4_i32_25] : memref<6x!tpu.dma_semaphore, #tpu.memory_space<semaphore_mem>> -> memref<1x!tpu.dma_semaphore, #tpu.memory_space<semaphore_mem>>
    %29 = tpu.memref_squeeze %28 : memref<1x!tpu.dma_semaphore, #tpu.memory_space<semaphore_mem>> -> memref<!tpu.dma_semaphore, #tpu.memory_space<semaphore_mem>>
    tpu.enqueue_dma source(%25 : memref<256x256xbf16, #tpu.memory_space<any>>) target(%27 : memref<256x256xbf16, #tpu.memory_space<vmem>>) target_semaphore(%29 : memref<!tpu.dma_semaphore, #tpu.memory_space<semaphore_mem>>)
    %c5_i32 = arith.constant 5 : i32
    %c5_i32_30 = arith.constant 5 : i32
    %c5_i32_31 = arith.constant 5 : i32
    %c0_i32_32 = arith.constant 0 : i32
    %c0_i32_33 = arith.constant 0 : i32
    %30 = tpu.memref_slice %arg3[%c5_i32, %c0_i32_32, %c0_i32_33] : memref<6x256x256xbf16, #tpu.memory_space<any>> -> memref<1x256x256xbf16, #tpu.memory_space<any>>
    %31 = tpu.memref_squeeze %30 : memref<1x256x256xbf16, #tpu.memory_space<any>> -> memref<256x256xbf16, #tpu.memory_space<any>>
    %c0_i32_34 = arith.constant 0 : i32
    %c0_i32_35 = arith.constant 0 : i32
    %32 = tpu.memref_slice %arg5[%c5_i32_30, %c0_i32_34, %c0_i32_35] : memref<6x256x256xbf16, #tpu.memory_space<vmem>> -> memref<1x256x256xbf16, #tpu.memory_space<vmem>>
    %33 = tpu.memref_squeeze %32 : memref<1x256x256xbf16, #tpu.memory_space<vmem>> -> memref<256x256xbf16, #tpu.memory_space<vmem>>
    %34 = tpu.memref_slice %arg6[%c5_i32_31] : memref<6x!tpu.dma_semaphore, #tpu.memory_space<semaphore_mem>> -> memref<1x!tpu.dma_semaphore, #tpu.memory_space<semaphore_mem>>
    %35 = tpu.memref_squeeze %34 : memref<1x!tpu.dma_semaphore, #tpu.memory_space<semaphore_mem>> -> memref<!tpu.dma_semaphore, #tpu.memory_space<semaphore_mem>>
    tpu.enqueue_dma source(%31 : memref<256x256xbf16, #tpu.memory_space<any>>) target(%33 : memref<256x256xbf16, #tpu.memory_space<vmem>>) target_semaphore(%35 : memref<!tpu.dma_semaphore, #tpu.memory_space<semaphore_mem>>)
    %c0 = arith.constant 0 : index
    %c0_36 = arith.constant 0 : index
    %36 = vector.load %arg1[%c0, %c0_36] : memref<8x256xf32, #tpu.memory_space<vmem>>, vector<8x256xf32>
    %37 = arith.truncf %36 : vector<8x256xf32> to vector<8x256xbf16>
    %c0_i32_37 = arith.constant 0 : i32
    %c0_i32_38 = arith.constant 0 : i32
    %c0_i32_39 = arith.constant 0 : i32
    %c0_i32_40 = arith.constant 0 : i32
    %c0_i32_41 = arith.constant 0 : i32
    %38 = tpu.memref_slice %arg3[%c0_i32_37, %c0_i32_40, %c0_i32_41] : memref<6x256x256xbf16, #tpu.memory_space<any>> -> memref<1x256x256xbf16, #tpu.memory_space<any>>
    %39 = tpu.memref_squeeze %38 : memref<1x256x256xbf16, #tpu.memory_space<any>> -> memref<256x256xbf16, #tpu.memory_space<any>>
    %c0_i32_42 = arith.constant 0 : i32
    %c0_i32_43 = arith.constant 0 : i32
    %40 = tpu.memref_slice %arg5[%c0_i32_38, %c0_i32_42, %c0_i32_43] : memref<6x256x256xbf16, #tpu.memory_space<vmem>> -> memref<1x256x256xbf16, #tpu.memory_space<vmem>>
    %41 = tpu.memref_squeeze %40 : memref<1x256x256xbf16, #tpu.memory_space<vmem>> -> memref<256x256xbf16, #tpu.memory_space<vmem>>
    %42 = tpu.memref_slice %arg6[%c0_i32_39] : memref<6x!tpu.dma_semaphore, #tpu.memory_space<semaphore_mem>> -> memref<1x!tpu.dma_semaphore, #tpu.memory_space<semaphore_mem>>
    %43 = tpu.memref_squeeze %42 : memref<1x!tpu.dma_semaphore, #tpu.memory_space<semaphore_mem>> -> memref<!tpu.dma_semaphore, #tpu.memory_space<semaphore_mem>>
    tpu.wait_dma2 semaphore(%43 : memref<!tpu.dma_semaphore, #tpu.memory_space<semaphore_mem>>) src(%39 : memref<256x256xbf16, #tpu.memory_space<any>>) dst(%41 : memref<256x256xbf16, #tpu.memory_space<vmem>>)
    %c0_44 = arith.constant 0 : index
    %c0_45 = arith.constant 0 : index
    %c0_46 = arith.constant 0 : index
    %44 = vector.load %arg5[%c0_44, %c0_45, %c0_46] : memref<6x256x256xbf16, #tpu.memory_space<vmem>>, vector<1x256x256xbf16>
    %45 = vector.shape_cast %44 : vector<1x256x256xbf16> to vector<256x256xbf16>
    %cst = arith.constant dense<0.000000e+00> : vector<8x256xf32>
    %46 = tpu.matmul %37, %45, %cst {dimension_numbers = #tpu.dot_dimension_numbers<[1], [0], [0], [1], [0, 0, 1, 1], [], []>} : vector<8x256xbf16>, vector<256x256xbf16>, vector<8x256xf32> -> vector<8x256xf32>
    %c0_47 = arith.constant 0 : index
    %c0_48 = arith.constant 0 : index
    %47 = vector.load %arg2[%c0_47, %c0_48] : memref<8x256xf32, #tpu.memory_space<vmem>>, vector<1x256xf32>
    %48 = vector.broadcast %47 : vector<1x256xf32> to vector<8x256xf32>
    %49 = arith.addf %46, %48 : vector<8x256xf32>
    %cst_49 = arith.constant 0.000000e+00 : f32
    %50 = vector.broadcast %cst_49 : f32 to vector<8x256xf32>
    %51 = arith.maximumf %49, %50 : vector<8x256xf32>
    %52 = arith.truncf %51 : vector<8x256xf32> to vector<8x256xbf16>
    %c1_i32_50 = arith.constant 1 : i32
    %c1_i32_51 = arith.constant 1 : i32
    %c1_i32_52 = arith.constant 1 : i32
    %c0_i32_53 = arith.constant 0 : i32
    %c0_i32_54 = arith.constant 0 : i32
    %53 = tpu.memref_slice %arg3[%c1_i32_50, %c0_i32_53, %c0_i32_54] : memref<6x256x256xbf16, #tpu.memory_space<any>> -> memref<1x256x256xbf16, #tpu.memory_space<any>>
    %54 = tpu.memref_squeeze %53 : memref<1x256x256xbf16, #tpu.memory_space<any>> -> memref<256x256xbf16, #tpu.memory_space<any>>
    %c0_i32_55 = arith.constant 0 : i32
    %c0_i32_56 = arith.constant 0 : i32
    %55 = tpu.memref_slice %arg5[%c1_i32_51, %c0_i32_55, %c0_i32_56] : memref<6x256x256xbf16, #tpu.memory_space<vmem>> -> memref<1x256x256xbf16, #tpu.memory_space<vmem>>
    %56 = tpu.memref_squeeze %55 : memref<1x256x256xbf16, #tpu.memory_space<vmem>> -> memref<256x256xbf16, #tpu.memory_space<vmem>>
    %57 = tpu.memref_slice %arg6[%c1_i32_52] : memref<6x!tpu.dma_semaphore, #tpu.memory_space<semaphore_mem>> -> memref<1x!tpu.dma_semaphore, #tpu.memory_space<semaphore_mem>>
    %58 = tpu.memref_squeeze %57 : memref<1x!tpu.dma_semaphore, #tpu.memory_space<semaphore_mem>> -> memref<!tpu.dma_semaphore, #tpu.memory_space<semaphore_mem>>
    tpu.wait_dma2 semaphore(%58 : memref<!tpu.dma_semaphore, #tpu.memory_space<semaphore_mem>>) src(%54 : memref<256x256xbf16, #tpu.memory_space<any>>) dst(%56 : memref<256x256xbf16, #tpu.memory_space<vmem>>)
    %c1 = arith.constant 1 : index
    %c0_57 = arith.constant 0 : index
    %c0_58 = arith.constant 0 : index
    %59 = vector.load %arg5[%c1, %c0_57, %c0_58] : memref<6x256x256xbf16, #tpu.memory_space<vmem>>, vector<1x256x256xbf16>
    %60 = vector.shape_cast %59 : vector<1x256x256xbf16> to vector<256x256xbf16>
    %cst_59 = arith.constant dense<0.000000e+00> : vector<8x256xf32>
    %61 = tpu.matmul %52, %60, %cst_59 {dimension_numbers = #tpu.dot_dimension_numbers<[1], [0], [0], [1], [0, 0, 1, 1], [], []>} : vector<8x256xbf16>, vector<256x256xbf16>, vector<8x256xf32> -> vector<8x256xf32>
    %c1_60 = arith.constant 1 : index
    %c0_61 = arith.constant 0 : index
    %62 = vector.load %arg2[%c1_60, %c0_61] : memref<8x256xf32, #tpu.memory_space<vmem>>, vector<1x256xf32>
    %63 = vector.broadcast %62 : vector<1x256xf32> to vector<8x256xf32>
    %64 = arith.addf %61, %63 : vector<8x256xf32>
    %cst_62 = arith.constant 0.000000e+00 : f32
    %65 = vector.broadcast %cst_62 : f32 to vector<8x256xf32>
    %66 = arith.maximumf %64, %65 : vector<8x256xf32>
    %67 = arith.truncf %66 : vector<8x256xf32> to vector<8x256xbf16>
    %c2_i32_63 = arith.constant 2 : i32
    %c2_i32_64 = arith.constant 2 : i32
    %c2_i32_65 = arith.constant 2 : i32
    %c0_i32_66 = arith.constant 0 : i32
    %c0_i32_67 = arith.constant 0 : i32
    %68 = tpu.memref_slice %arg3[%c2_i32_63, %c0_i32_66, %c0_i32_67] : memref<6x256x256xbf16, #tpu.memory_space<any>> -> memref<1x256x256xbf16, #tpu.memory_space<any>>
    %69 = tpu.memref_squeeze %68 : memref<1x256x256xbf16, #tpu.memory_space<any>> -> memref<256x256xbf16, #tpu.memory_space<any>>
    %c0_i32_68 = arith.constant 0 : i32
    %c0_i32_69 = arith.constant 0 : i32
    %70 = tpu.memref_slice %arg5[%c2_i32_64, %c0_i32_68, %c0_i32_69] : memref<6x256x256xbf16, #tpu.memory_space<vmem>> -> memref<1x256x256xbf16, #tpu.memory_space<vmem>>
    %71 = tpu.memref_squeeze %70 : memref<1x256x256xbf16, #tpu.memory_space<vmem>> -> memref<256x256xbf16, #tpu.memory_space<vmem>>
    %72 = tpu.memref_slice %arg6[%c2_i32_65] : memref<6x!tpu.dma_semaphore, #tpu.memory_space<semaphore_mem>> -> memref<1x!tpu.dma_semaphore, #tpu.memory_space<semaphore_mem>>
    %73 = tpu.memref_squeeze %72 : memref<1x!tpu.dma_semaphore, #tpu.memory_space<semaphore_mem>> -> memref<!tpu.dma_semaphore, #tpu.memory_space<semaphore_mem>>
    tpu.wait_dma2 semaphore(%73 : memref<!tpu.dma_semaphore, #tpu.memory_space<semaphore_mem>>) src(%69 : memref<256x256xbf16, #tpu.memory_space<any>>) dst(%71 : memref<256x256xbf16, #tpu.memory_space<vmem>>)
    %c2 = arith.constant 2 : index
    %c0_70 = arith.constant 0 : index
    %c0_71 = arith.constant 0 : index
    %74 = vector.load %arg5[%c2, %c0_70, %c0_71] : memref<6x256x256xbf16, #tpu.memory_space<vmem>>, vector<1x256x256xbf16>
    %75 = vector.shape_cast %74 : vector<1x256x256xbf16> to vector<256x256xbf16>
    %cst_72 = arith.constant dense<0.000000e+00> : vector<8x256xf32>
    %76 = tpu.matmul %67, %75, %cst_72 {dimension_numbers = #tpu.dot_dimension_numbers<[1], [0], [0], [1], [0, 0, 1, 1], [], []>} : vector<8x256xbf16>, vector<256x256xbf16>, vector<8x256xf32> -> vector<8x256xf32>
    %c2_73 = arith.constant 2 : index
    %c0_74 = arith.constant 0 : index
    %77 = vector.load %arg2[%c2_73, %c0_74] : memref<8x256xf32, #tpu.memory_space<vmem>>, vector<1x256xf32>
    %78 = vector.broadcast %77 : vector<1x256xf32> to vector<8x256xf32>
    %79 = arith.addf %76, %78 : vector<8x256xf32>
    %cst_75 = arith.constant 0.000000e+00 : f32
    %80 = vector.broadcast %cst_75 : f32 to vector<8x256xf32>
    %81 = arith.maximumf %79, %80 : vector<8x256xf32>
    %82 = arith.truncf %81 : vector<8x256xf32> to vector<8x256xbf16>
    %c3_i32_76 = arith.constant 3 : i32
    %c3_i32_77 = arith.constant 3 : i32
    %c3_i32_78 = arith.constant 3 : i32
    %c0_i32_79 = arith.constant 0 : i32
    %c0_i32_80 = arith.constant 0 : i32
    %83 = tpu.memref_slice %arg3[%c3_i32_76, %c0_i32_79, %c0_i32_80] : memref<6x256x256xbf16, #tpu.memory_space<any>> -> memref<1x256x256xbf16, #tpu.memory_space<any>>
    %84 = tpu.memref_squeeze %83 : memref<1x256x256xbf16, #tpu.memory_space<any>> -> memref<256x256xbf16, #tpu.memory_space<any>>
    %c0_i32_81 = arith.constant 0 : i32
    %c0_i32_82 = arith.constant 0 : i32
    %85 = tpu.memref_slice %arg5[%c3_i32_77, %c0_i32_81, %c0_i32_82] : memref<6x256x256xbf16, #tpu.memory_space<vmem>> -> memref<1x256x256xbf16, #tpu.memory_space<vmem>>
    %86 = tpu.memref_squeeze %85 : memref<1x256x256xbf16, #tpu.memory_space<vmem>> -> memref<256x256xbf16, #tpu.memory_space<vmem>>
    %87 = tpu.memref_slice %arg6[%c3_i32_78] : memref<6x!tpu.dma_semaphore, #tpu.memory_space<semaphore_mem>> -> memref<1x!tpu.dma_semaphore, #tpu.memory_space<semaphore_mem>>
    %88 = tpu.memref_squeeze %87 : memref<1x!tpu.dma_semaphore, #tpu.memory_space<semaphore_mem>> -> memref<!tpu.dma_semaphore, #tpu.memory_space<semaphore_mem>>
    tpu.wait_dma2 semaphore(%88 : memref<!tpu.dma_semaphore, #tpu.memory_space<semaphore_mem>>) src(%84 : memref<256x256xbf16, #tpu.memory_space<any>>) dst(%86 : memref<256x256xbf16, #tpu.memory_space<vmem>>)
    %c3 = arith.constant 3 : index
    %c0_83 = arith.constant 0 : index
    %c0_84 = arith.constant 0 : index
    %89 = vector.load %arg5[%c3, %c0_83, %c0_84] : memref<6x256x256xbf16, #tpu.memory_space<vmem>>, vector<1x256x256xbf16>
    %90 = vector.shape_cast %89 : vector<1x256x256xbf16> to vector<256x256xbf16>
    %cst_85 = arith.constant dense<0.000000e+00> : vector<8x256xf32>
    %91 = tpu.matmul %82, %90, %cst_85 {dimension_numbers = #tpu.dot_dimension_numbers<[1], [0], [0], [1], [0, 0, 1, 1], [], []>} : vector<8x256xbf16>, vector<256x256xbf16>, vector<8x256xf32> -> vector<8x256xf32>
    %c3_86 = arith.constant 3 : index
    %c0_87 = arith.constant 0 : index
    %92 = vector.load %arg2[%c3_86, %c0_87] : memref<8x256xf32, #tpu.memory_space<vmem>>, vector<1x256xf32>
    %93 = vector.broadcast %92 : vector<1x256xf32> to vector<8x256xf32>
    %94 = arith.addf %91, %93 : vector<8x256xf32>
    %cst_88 = arith.constant 0.000000e+00 : f32
    %95 = vector.broadcast %cst_88 : f32 to vector<8x256xf32>
    %96 = arith.maximumf %94, %95 : vector<8x256xf32>
    %97 = arith.truncf %96 : vector<8x256xf32> to vector<8x256xbf16>
    %c4_i32_89 = arith.constant 4 : i32
    %c4_i32_90 = arith.constant 4 : i32
    %c4_i32_91 = arith.constant 4 : i32
    %c0_i32_92 = arith.constant 0 : i32
    %c0_i32_93 = arith.constant 0 : i32
    %98 = tpu.memref_slice %arg3[%c4_i32_89, %c0_i32_92, %c0_i32_93] : memref<6x256x256xbf16, #tpu.memory_space<any>> -> memref<1x256x256xbf16, #tpu.memory_space<any>>
    %99 = tpu.memref_squeeze %98 : memref<1x256x256xbf16, #tpu.memory_space<any>> -> memref<256x256xbf16, #tpu.memory_space<any>>
    %c0_i32_94 = arith.constant 0 : i32
    %c0_i32_95 = arith.constant 0 : i32
    %100 = tpu.memref_slice %arg5[%c4_i32_90, %c0_i32_94, %c0_i32_95] : memref<6x256x256xbf16, #tpu.memory_space<vmem>> -> memref<1x256x256xbf16, #tpu.memory_space<vmem>>
    %101 = tpu.memref_squeeze %100 : memref<1x256x256xbf16, #tpu.memory_space<vmem>> -> memref<256x256xbf16, #tpu.memory_space<vmem>>
    %102 = tpu.memref_slice %arg6[%c4_i32_91] : memref<6x!tpu.dma_semaphore, #tpu.memory_space<semaphore_mem>> -> memref<1x!tpu.dma_semaphore, #tpu.memory_space<semaphore_mem>>
    %103 = tpu.memref_squeeze %102 : memref<1x!tpu.dma_semaphore, #tpu.memory_space<semaphore_mem>> -> memref<!tpu.dma_semaphore, #tpu.memory_space<semaphore_mem>>
    tpu.wait_dma2 semaphore(%103 : memref<!tpu.dma_semaphore, #tpu.memory_space<semaphore_mem>>) src(%99 : memref<256x256xbf16, #tpu.memory_space<any>>) dst(%101 : memref<256x256xbf16, #tpu.memory_space<vmem>>)
    %c4 = arith.constant 4 : index
    %c0_96 = arith.constant 0 : index
    %c0_97 = arith.constant 0 : index
    %104 = vector.load %arg5[%c4, %c0_96, %c0_97] : memref<6x256x256xbf16, #tpu.memory_space<vmem>>, vector<1x256x256xbf16>
    %105 = vector.shape_cast %104 : vector<1x256x256xbf16> to vector<256x256xbf16>
    %cst_98 = arith.constant dense<0.000000e+00> : vector<8x256xf32>
    %106 = tpu.matmul %97, %105, %cst_98 {dimension_numbers = #tpu.dot_dimension_numbers<[1], [0], [0], [1], [0, 0, 1, 1], [], []>} : vector<8x256xbf16>, vector<256x256xbf16>, vector<8x256xf32> -> vector<8x256xf32>
    %c4_99 = arith.constant 4 : index
    %c0_100 = arith.constant 0 : index
    %107 = vector.load %arg2[%c4_99, %c0_100] : memref<8x256xf32, #tpu.memory_space<vmem>>, vector<1x256xf32>
    %108 = vector.broadcast %107 : vector<1x256xf32> to vector<8x256xf32>
    %109 = arith.addf %106, %108 : vector<8x256xf32>
    %cst_101 = arith.constant 0.000000e+00 : f32
    %110 = vector.broadcast %cst_101 : f32 to vector<8x256xf32>
    %111 = arith.maximumf %109, %110 : vector<8x256xf32>
    %112 = arith.truncf %111 : vector<8x256xf32> to vector<8x256xbf16>
    %c5_i32_102 = arith.constant 5 : i32
    %c5_i32_103 = arith.constant 5 : i32
    %c5_i32_104 = arith.constant 5 : i32
    %c0_i32_105 = arith.constant 0 : i32
    %c0_i32_106 = arith.constant 0 : i32
    %113 = tpu.memref_slice %arg3[%c5_i32_102, %c0_i32_105, %c0_i32_106] : memref<6x256x256xbf16, #tpu.memory_space<any>> -> memref<1x256x256xbf16, #tpu.memory_space<any>>
    %114 = tpu.memref_squeeze %113 : memref<1x256x256xbf16, #tpu.memory_space<any>> -> memref<256x256xbf16, #tpu.memory_space<any>>
    %c0_i32_107 = arith.constant 0 : i32
    %c0_i32_108 = arith.constant 0 : i32
    %115 = tpu.memref_slice %arg5[%c5_i32_103, %c0_i32_107, %c0_i32_108] : memref<6x256x256xbf16, #tpu.memory_space<vmem>> -> memref<1x256x256xbf16, #tpu.memory_space<vmem>>
    %116 = tpu.memref_squeeze %115 : memref<1x256x256xbf16, #tpu.memory_space<vmem>> -> memref<256x256xbf16, #tpu.memory_space<vmem>>
    %117 = tpu.memref_slice %arg6[%c5_i32_104] : memref<6x!tpu.dma_semaphore, #tpu.memory_space<semaphore_mem>> -> memref<1x!tpu.dma_semaphore, #tpu.memory_space<semaphore_mem>>
    %118 = tpu.memref_squeeze %117 : memref<1x!tpu.dma_semaphore, #tpu.memory_space<semaphore_mem>> -> memref<!tpu.dma_semaphore, #tpu.memory_space<semaphore_mem>>
    tpu.wait_dma2 semaphore(%118 : memref<!tpu.dma_semaphore, #tpu.memory_space<semaphore_mem>>) src(%114 : memref<256x256xbf16, #tpu.memory_space<any>>) dst(%116 : memref<256x256xbf16, #tpu.memory_space<vmem>>)
    %c5 = arith.constant 5 : index
    %c0_109 = arith.constant 0 : index
    %c0_110 = arith.constant 0 : index
    %119 = vector.load %arg5[%c5, %c0_109, %c0_110] : memref<6x256x256xbf16, #tpu.memory_space<vmem>>, vector<1x256x256xbf16>
    %120 = vector.shape_cast %119 : vector<1x256x256xbf16> to vector<256x256xbf16>
    %cst_111 = arith.constant dense<0.000000e+00> : vector<8x256xf32>
    %121 = tpu.matmul %112, %120, %cst_111 {dimension_numbers = #tpu.dot_dimension_numbers<[1], [0], [0], [1], [0, 0, 1, 1], [], []>} : vector<8x256xbf16>, vector<256x256xbf16>, vector<8x256xf32> -> vector<8x256xf32>
    %c5_112 = arith.constant 5 : index
    %c0_113 = arith.constant 0 : index
    %122 = vector.load %arg2[%c5_112, %c0_113] : memref<8x256xf32, #tpu.memory_space<vmem>>, vector<1x256xf32>
    %123 = vector.broadcast %122 : vector<1x256xf32> to vector<8x256xf32>
    %124 = arith.addf %121, %123 : vector<8x256xf32>
    %c0_114 = arith.constant 0 : index
    %c0_115 = arith.constant 0 : index
    %125 = vector.load %arg4[%c0_114, %c0_115] : memref<8x256xf32, #tpu.memory_space<vmem>>, vector<8x256xf32>
    tpu.vector_store %arg4[%c0_114, %c0_115], %124 {strides = array<i32>} : memref<8x256xf32, #tpu.memory_space<vmem>>, vector<8x256xf32>,
    return
  }
  func.func @transform_0(%arg0: i32) -> (i32, i32) {
    %c0_i32 = arith.constant 0 : i32
    %c0_i32_0 = arith.constant 0 : i32
    return %arg0, %c0_i32 : i32, i32
  }
  func.func @transform_1(%arg0: i32) -> (i32, i32) {
    %c0_i32 = arith.constant 0 : i32
    %c0_i32_0 = arith.constant 0 : i32
    %c0_i32_1 = arith.constant 0 : i32
    return %c0_i32, %c0_i32_0 : i32, i32
  }
  func.func @transform_3(%arg0: i32) -> (i32, i32) {
    %c0_i32 = arith.constant 0 : i32
    %c0_i32_0 = arith.constant 0 : i32
    return %arg0, %c0_i32 : i32, i32
  }
}

</mosaic_0001>

<llo_original>
// kernel: tpu_custom_call.1
$region0: #{tpu_custom_call.1}
  #allocation0 [shape = 'u32[]', space=smem, size = 0x4, offset = 0x4, fixed_abs, tag = 'smem constant byte address 0x4 - core index']
  #allocation1 [shape = 'u32[144,128]{1,0:T(1,128)}', space=vmem, size = 0x12000, scoped, tag = 'internal scratch']
  #allocation2 [shape = 'bf16[6,256,256]{2,1,0:T(16,128)(2,1)}', space=vmem, size = 0xc0000, scoped, tag = 'scratch operand']
  #allocation3 [shape = 's32[6]{0}', space=sflag, size = 0x18, scoped, tag = 'scratch operand']
  #allocation10 [shape = 's32[]', space=sflag, size = 0x4, offset = 0, fixed_abs, tag = 'sflag constant byte address 0x0 - dummy sync flag']
  #allocation12 [shape = 's32[]', space=sflag, size = 0x4, offset = 0, fixed_abs, tag = 'sflag constant byte address 0x0 - dummy sync flag']
  #allocation14 [shape = 's32[]', space=sflag, size = 0x4, offset = 0, fixed_abs, tag = 'sflag constant byte address 0x0 - dummy sync flag']
  #allocation16 [shape = 's32[]', space=sflag, size = 0x4, offset = 0, fixed_abs, tag = 'sflag constant byte address 0x0 - dummy sync flag']
  #allocation18 [shape = 's32[]', space=sflag, size = 0x4, offset = 0, fixed_abs, tag = 'sflag constant byte address 0x0 - dummy sync flag']
  #allocation20 [shape = 's32[]', space=sflag, size = 0x4, offset = 0, fixed_abs, tag = 'sflag constant byte address 0x0 - dummy sync flag']
  %s0 = inlined_call_operand.hbm [shape: f32[8,256], index: 0, kind: input, shape index: {}]
  %s1 = inlined_call_operand.hbm [shape: f32[8,256], index: 1, kind: input, shape index: {}]
  %s2 = inlined_call_operand.hbm [shape: bf16[6,256,256], index: 2, kind: input, shape index: {}]
  %s3 = inlined_call_operand.hbm [shape: f32[8,256], index: 3, kind: output, shape index: {}]
  %s4 = sld [smem:[#allocation0]]
  $region26: #{tpu_custom_call.1} parent=0
    _
  %s6 = ssub.s32 1, %s4
  %s7 = scalar_select 0, %s6, %s4
  $region1: #{tpu_custom_call.1} parent=0
    #allocation4 [shape = 'u8[8192]{0}', space=vmem, size = 0x2000, scoped, tag = 'input window, operand 0, single buffered']
    #allocation5 [shape = 's32[1]{0}', space=sflag, size = 0x4, scoped, tag = 'scoped memory for tpu_custom_call.1']
    #allocation6 [shape = 's32[1]{0}', space=sflag, size = 0x4, scoped, tag = 'scoped memory for tpu_custom_call.1']
    #allocation7 [shape = 'u8[8192]{0}', space=vmem, size = 0x2000, scoped, tag = 'input window, operand 1, single buffered']
    #allocation8 [shape = 's32[1]{0}', space=sflag, size = 0x4, scoped, tag = 'scoped memory for tpu_custom_call.1']
    #allocation9 [shape = 'u8[8192]{0}', space=vmem, size = 0x2000, scoped, tag = 'output window, operand 0, single buffered']
    #allocation11 [shape = 'u32[9]{0}', space=smem, size = 0x24, scoped, tag = 'DMA stride descriptor']
    #allocation13 [shape = 'u32[9]{0}', space=smem, size = 0x24, scoped, tag = 'DMA stride descriptor']
    #allocation15 [shape = 'u32[9]{0}', space=smem, size = 0x24, scoped, tag = 'DMA stride descriptor']
    #allocation17 [shape = 'u32[9]{0}', space=smem, size = 0x24, scoped, tag = 'DMA stride descriptor']
    #allocation19 [shape = 'u32[9]{0}', space=smem, size = 0x24, scoped, tag = 'DMA stride descriptor']
    #allocation21 [shape = 'u32[9]{0}', space=smem, size = 0x24, scoped, tag = 'DMA stride descriptor']
    %8 = vsyncpa [#allocation5], 0
    %9 = vsyncpa [#allocation8], 0
    %10 = vsyncpa [#allocation6], 0
    // Predicated region
    $region2: #{tpu_custom_call.1} parent=1 // pred_check
      _
    $region3: #{tpu_custom_call.1} parent=1 // pred_check_branch
      %12 = sbr.rel (0) target = $region5
    $region4: #{tpu_custom_call.1} parent=1 // pred_region
      %s14 = ssub.s32 256, 256
      %15 = vsyncadd [#allocation5], %s14
      %s17 = sshll.u32 [#allocation4], 4
      %s18 = int_to_ptr.vmem [resolvable:$true] %s17
      %20 = dma.hbm_to_vmem [thread:$0]  %s0, 256, %s18, [#allocation5]
    $region5: #{tpu_custom_call.1} parent=1 // pred_fallthru
      _
    // Predicated region
    $region6: #{tpu_custom_call.1} parent=1 // pred_check
      _
    $region7: #{tpu_custom_call.1} parent=1 // pred_check_branch
      %22 = sbr.rel (0) target = $region9
    $region8: #{tpu_custom_call.1} parent=1 // pred_region
      %s24 = ssub.s32 256, 256
      %25 = vsyncadd [#allocation8], %s24
      %s27 = sshll.u32 [#allocation7], 4
      %s28 = int_to_ptr.vmem [resolvable:$true] %s27
      %30 = dma.hbm_to_vmem [thread:$0]  %s1, 256, %s28, [#allocation8]
    $region9: #{tpu_custom_call.1} parent=1 // pred_fallthru
      _
    // Predicated region
    $region10: #{tpu_custom_call.1} parent=1 // pred_check
      _
    $region11: #{tpu_custom_call.1} parent=1 // pred_check_branch
      %32 = sbr.rel (0) target = $region13
    $region12: #{tpu_custom_call.1} parent=1 // pred_region
      %33 = dma.done [#allocation5], 256
    $region13: #{tpu_custom_call.1} parent=1 // pred_fallthru
      _
    // Predicated region
    $region14: #{tpu_custom_call.1} parent=1 // pred_check
      _
    $region15: #{tpu_custom_call.1} parent=1 // pred_check_branch
      %35 = sbr.rel (0) target = $region17
    $region16: #{tpu_custom_call.1} parent=1 // pred_region
      %36 = dma.done [#allocation8], 256
    $region17: #{tpu_custom_call.1} parent=1 // pred_fallthru
      _
    %s38 = sshll.u32 1, 14
    %s39 = sxor.u32 4294967295, %s38
    %s41 = sld [smem:[#allocation0]]
    %s42 = sadd.s32 2, %s41
    %s44 = sshll.u32 7, 26
    %s45 = sxor.u32 4294967295, %s44
    %s46 = sand.u32 0, %s45
    %s47 = sshll.u32 %s42, 26
    %s48 = sor.u32 %s46, %s47
    %s49 = sshll.u32 [#allocation2], 4
    %s50 = int_to_ptr.vmem [resolvable:$true] %s49
    %53 = sst [smem:[#allocation11]] 256
    %s54 = scalar_lea.smem [#allocation11], 1
    %55 = sst [smem:[%s54]] 256
    %s56 = scalar_lea.smem [#allocation11], 2
    %57 = sst [smem:[%s56]] 2
    %s58 = scalar_lea.smem [#allocation11], 3
    %59 = sst [smem:[%s58]] 64
    %s60 = scalar_lea.smem [#allocation11], 4
    %61 = sst [smem:[%s60]] 128
    %s62 = scalar_lea.smem [#allocation11], 5
    %63 = sst [smem:[%s62]] 2
    %s64 = scalar_lea.smem [#allocation11], 6
    %65 = sst [smem:[%s64]] 128
    %s66 = scalar_lea.smem [#allocation11], 7
    %67 = sst [smem:[%s66]] 64
    %s68 = scalar_lea.smem [#allocation11], 8
    %69 = sst [smem:[%s68]] 4
    %71 = dma.general %s2, 4096, %s50, [#allocation3], [#allocation10], [#allocation11], %s48, 0
    %s72 = scalar_lea.hbm %s2, 4096
    %s73 = scalar_lea.vmem [#allocation2], 256
    %s74 = scalar_lea.sflag [#allocation3], 1
    %s76 = sshll.u32 1, 14
    %s77 = sxor.u32 4294967295, %s76
    %s79 = sadd.s32 2, %s41
    %s81 = sshll.u32 7, 26
    %s82 = sxor.u32 4294967295, %s81
    %s83 = sand.u32 0, %s82
    %s84 = sshll.u32 %s79, 26
    %s85 = sor.u32 %s83, %s84
    %s86 = sshll.u32 %s73, 4
    %s87 = int_to_ptr.vmem [resolvable:$true] %s86
    %90 = sst [smem:[#allocation13]] 256
    %s91 = scalar_lea.smem [#allocation13], 1
    %92 = sst [smem:[%s91]] 256
    %s93 = scalar_lea.smem [#allocation13], 2
    %94 = sst [smem:[%s93]] 2
    %s95 = scalar_lea.smem [#allocation13], 3
    %96 = sst [smem:[%s95]] 64
    %s97 = scalar_lea.smem [#allocation13], 4
    %98 = sst [smem:[%s97]] 128
    %s99 = scalar_lea.smem [#allocation13], 5
    %100 = sst [smem:[%s99]] 2
    %s101 = scalar_lea.smem [#allocation13], 6
    %102 = sst [smem:[%s101]] 128
    %s103 = scalar_lea.smem [#allocation13], 7
    %104 = sst [smem:[%s103]] 64
    %s105 = scalar_lea.smem [#allocation13], 8
    %106 = sst [smem:[%s105]] 4
    %108 = dma.general %s72, 4096, %s87, %s74, [#allocation12], [#allocation13], %s85, 0
    %s109 = scalar_lea.hbm %s2, 8192
    %s110 = scalar_lea.vmem [#allocation2], 512
    %s111 = scalar_lea.sflag [#allocation3], 2
    %s113 = sshll.u32 1, 14
    %s114 = sxor.u32 4294967295, %s113
    %s116 = sadd.s32 2, %s41
    %s118 = sshll.u32 7, 26
    %s119 = sxor.u32 4294967295, %s118
    %s120 = sand.u32 0, %s119
    %s121 = sshll.u32 %s116, 26
    %s122 = sor.u32 %s120, %s121
    %s123 = sshll.u32 %s110, 4
    %s124 = int_to_ptr.vmem [resolvable:$true] %s123
    %127 = sst [smem:[#allocation15]] 256
    %s128 = scalar_lea.smem [#allocation15], 1
    %129 = sst [smem:[%s128]] 256
    %s130 = scalar_lea.smem [#allocation15], 2
    %131 = sst [smem:[%s130]] 2
    %s132 = scalar_lea.smem [#allocation15], 3
    %133 = sst [smem:[%s132]] 64
    %s134 = scalar_lea.smem [#allocation15], 4
    %135 = sst [smem:[%s134]] 128
    %s136 = scalar_lea.smem [#allocation15], 5
    %137 = sst [smem:[%s136]] 2
    %s138 = scalar_lea.smem [#allocation15], 6
    %139 = sst [smem:[%s138]] 128
    %s140 = scalar_lea.smem [#allocation15], 7
    %141 = sst [smem:[%s140]] 64
    %s142 = scalar_lea.smem [#allocation15], 8
    %143 = sst [smem:[%s142]] 4
    %145 = dma.general %s109, 4096, %s124, %s111, [#allocation14], [#allocation15], %s122, 0
    %s146 = scalar_lea.hbm %s2, 12288
    %s147 = scalar_lea.vmem [#allocation2], 768
    %s148 = scalar_lea.sflag [#allocation3], 3
    %s150 = sshll.u32 1, 14
    %s151 = sxor.u32 4294967295, %s150
    %s153 = sadd.s32 2, %s41
    %s155 = sshll.u32 7, 26
    %s156 = sxor.u32 4294967295, %s155
    %s157 = sand.u32 0, %s156
    %s158 = sshll.u32 %s153, 26
    %s159 = sor.u32 %s157, %s158
    %s160 = sshll.u32 %s147, 4
    %s161 = int_to_ptr.vmem [resolvable:$true] %s160
    %164 = sst [smem:[#allocation17]] 256
    %s165 = scalar_lea.smem [#allocation17], 1
    %166 = sst [smem:[%s165]] 256
    %s167 = scalar_lea.smem [#allocation17], 2
    %168 = sst [smem:[%s167]] 2
    %s169 = scalar_lea.smem [#allocation17], 3
    %170 = sst [smem:[%s169]] 64
    %s171 = scalar_lea.smem [#allocation17], 4
    %172 = sst [smem:[%s171]] 128
    %s173 = scalar_lea.smem [#allocation17], 5
    %174 = sst [smem:[%s173]] 2
    %s175 = scalar_lea.smem [#allocation17], 6
    %176 = sst [smem:[%s175]] 128
    %s177 = scalar_lea.smem [#allocation17], 7
    %178 = sst [smem:[%s177]] 64
    %s179 = scalar_lea.smem [#allocation17], 8
    %180 = sst [smem:[%s179]] 4
    %182 = dma.general %s146, 4096, %s161, %s148, [#allocation16], [#allocation17], %s159, 0
    %s183 = scalar_lea.hbm %s2, 16384
    %s184 = scalar_lea.vmem [#allocation2], 1024
    %s185 = scalar_lea.sflag [#allocation3], 4
    %s187 = sshll.u32 1, 14
    %s188 = sxor.u32 4294967295, %s187
    %s190 = sadd.s32 2, %s41
    %s192 = sshll.u32 7, 26
    %s193 = sxor.u32 4294967295, %s192
    %s194 = sand.u32 0, %s193
    %s195 = sshll.u32 %s190, 26
    %s196 = sor.u32 %s194, %s195
    %s197 = sshll.u32 %s184, 4
    %s198 = int_to_ptr.vmem [resolvable:$true] %s197
    %201 = sst [smem:[#allocation19]] 256
    %s202 = scalar_lea.smem [#allocation19], 1
    %203 = sst [smem:[%s202]] 256
    %s204 = scalar_lea.smem [#allocation19], 2
    %205 = sst [smem:[%s204]] 2
    %s206 = scalar_lea.smem [#allocation19], 3
    %207 = sst [smem:[%s206]] 64
    %s208 = scalar_lea.smem [#allocation19], 4
    %209 = sst [smem:[%s208]] 128
    %s210 = scalar_lea.smem [#allocation19], 5
    %211 = sst [smem:[%s210]] 2
    %s212 = scalar_lea.smem [#allocation19], 6
    %213 = sst [smem:[%s212]] 128
    %s214 = scalar_lea.smem [#allocation19], 7
    %215 = sst [smem:[%s214]] 64
    %s216 = scalar_lea.smem [#allocation19], 8
    %217 = sst [smem:[%s216]] 4
    %219 = dma.general %s183, 4096, %s198, %s185, [#allocation18], [#allocation19], %s196, 0
    %s220 = scalar_lea.hbm %s2, 20480
    %s221 = scalar_lea.vmem [#allocation2], 1280
    %s222 = scalar_lea.sflag [#allocation3], 5
    %s224 = sshll.u32 1, 14
    %s225 = sxor.u32 4294967295, %s224
    %s227 = sadd.s32 2, %s41
    %s229 = sshll.u32 7, 26
    %s230 = sxor.u32 4294967295, %s229
    %s231 = sand.u32 0, %s230
    %s232 = sshll.u32 %s227, 26
    %s233 = sor.u32 %s231, %s232
    %s234 = sshll.u32 %s221, 4
    %s235 = int_to_ptr.vmem [resolvable:$true] %s234
    %238 = sst [smem:[#allocation21]] 256
    %s239 = scalar_lea.smem [#allocation21], 1
    %240 = sst [smem:[%s239]] 256
    %s241 = scalar_lea.smem [#allocation21], 2
    %242 = sst [smem:[%s241]] 2
    %s243 = scalar_lea.smem [#allocation21], 3
    %244 = sst [smem:[%s243]] 64
    %s245 = scalar_lea.smem [#allocation21], 4
    %246 = sst [smem:[%s245]] 128
    %s247 = scalar_lea.smem [#allocation21], 5
    %248 = sst [smem:[%s247]] 2
    %s249 = scalar_lea.smem [#allocation21], 6
    %250 = sst [smem:[%s249]] 128
    %s251 = scalar_lea.smem [#allocation21], 7
    %252 = sst [smem:[%s251]] 64
    %s253 = scalar_lea.smem [#allocation21], 8
    %254 = sst [smem:[%s253]] 4
    %256 = dma.general %s220, 4096, %s235, %s222, [#allocation20], [#allocation21], %s233, 0
    %v257 = vld [vmem:[#allocation4] sm:$0xff]
    %v258 = vld [vmem:[#allocation4 + $0x8] sm:$0xff]
    %v259 = vpack.c.bf16 %v257, %v257
    %v260 = vpack.c.bf16 %v258, %v258
    %s261 = smul.u32 4, 32
    %s262 = smul.u32 %s261, 2
    %s263 = sshll.u32 %s262, 4
    %264 = dma.done [#allocation3], %s263
    %v265 = vld [vmem:[#allocation2] sm:$0xff]
    %v266 = vld [vmem:[#allocation2 + $0x8] sm:$0xff]
    %v267 = vld [vmem:[#allocation2 + $0x10] sm:$0xff]
    %v268 = vld [vmem:[#allocation2 + $0x18] sm:$0xff]
    %v269 = vld [vmem:[#allocation2 + $0x20] sm:$0xff]
    %v270 = vld [vmem:[#allocation2 + $0x28] sm:$0xff]
    %v271 = vld [vmem:[#allocation2 + $0x30] sm:$0xff]
    %v272 = vld [vmem:[#allocation2 + $0x38] sm:$0xff]
    %v273 = vld [vmem:[#allocation2 + $0x40] sm:$0xff]
    %v274 = vld [vmem:[#allocation2 + $0x48] sm:$0xff]
    %v275 = vld [vmem:[#allocation2 + $0x50] sm:$0xff]
    %v276 = vld [vmem:[#allocation2 + $0x58] sm:$0xff]
    %v277 = vld [vmem:[#allocation2 + $0x60] sm:$0xff]
    %v278 = vld [vmem:[#allocation2 + $0x68] sm:$0xff]
    %v279 = vld [vmem:[#allocation2 + $0x70] sm:$0xff]
    %v280 = vld [vmem:[#allocation2 + $0x78] sm:$0xff]
    %v281 = vld [vmem:[#allocation2 + $0x80] sm:$0xff]
    %v282 = vld [vmem:[#allocation2 + $0x88] sm:$0xff]
    %v283 = vld [vmem:[#allocation2 + $0x90] sm:$0xff]
    %v284 = vld [vmem:[#allocation2 + $0x98] sm:$0xff]
    %v285 = vld [vmem:[#allocation2 + $0xa0] sm:$0xff]
    %v286 = vld [vmem:[#allocation2 + $0xa8] sm:$0xff]
    %v287 = vld [vmem:[#allocation2 + $0xb0] sm:$0xff]
    %v288 = vld [vmem:[#allocation2 + $0xb8] sm:$0xff]
    %v289 = vld [vmem:[#allocation2 + $0xc0] sm:$0xff]
    %v290 = vld [vmem:[#allocation2 + $0xc8] sm:$0xff]
    %v291 = vld [vmem:[#allocation2 + $0xd0] sm:$0xff]
    %v292 = vld [vmem:[#allocation2 + $0xd8] sm:$0xff]
    %v293 = vld [vmem:[#allocation2 + $0xe0] sm:$0xff]
    %v294 = vld [vmem:[#allocation2 + $0xe8] sm:$0xff]
    %v295 = vld [vmem:[#allocation2 + $0xf0] sm:$0xff]
    %v296 = vld [vmem:[#allocation2 + $0xf8] sm:$0xff]
    %v297 = vld [vmem:[#allocation7] ss:$8 sm:$0x3]
    %v299 = vlaneseq
    %v300 = vshrl.u32 %v299, 7
    %v301 = vsub.s32 0, %v300
    %v302 = vrot.slane %v297, %v301
    %v303 = vlaneseq
    %v304 = vshrl.u32 %v303, 7
    %v305 = vsub.s32 1, %v304
    %v306 = vrot.slane %v297, %v305
    %309 = vmatprep.subr.bf16.mxu0 %v266
    %310 = vmatpush1.bf16.msra.mxu0 %v265
    %311 = vmatprep.subr.bf16.mxu0 %v268
    %312 = vmatpush1.bf16.msra.mxu0 %v267
    %313 = vmatprep.subr.bf16.mxu0 %v270
    %314 = vmatpush1.bf16.msra.mxu0 %v269
    %315 = vmatprep.subr.bf16.mxu0 %v272
    %316 = vmatpush1.bf16.msra.mxu0 %v271
    %317 = vmatprep.subr.bf16.mxu0 %v274
    %318 = vmatpush1.bf16.msra.mxu0 %v273
    %319 = vmatprep.subr.bf16.mxu0 %v276
    %320 = vmatpush1.bf16.msra.mxu0 %v275
    %321 = vmatprep.subr.bf16.mxu0 %v278
    %322 = vmatpush1.bf16.msra.mxu0 %v277
    %323 = vmatprep.subr.bf16.mxu0 %v280
    %324 = vmatpush1.bf16.msra.mxu0 %v279
    %325 = vmatprep.subr.bf16.mxu0 %v282
    %326 = vmatpush1.bf16.msra.mxu0 %v281
    %327 = vmatprep.subr.bf16.mxu0 %v284
    %328 = vmatpush1.bf16.msra.mxu0 %v283
    %329 = vmatprep.subr.bf16.mxu0 %v286
    %330 = vmatpush1.bf16.msra.mxu0 %v285
    %331 = vmatprep.subr.bf16.mxu0 %v288
    %332 = vmatpush1.bf16.msra.mxu0 %v287
    %333 = vmatprep.subr.bf16.mxu0 %v290
    %334 = vmatpush1.bf16.msra.mxu0 %v289
    %335 = vmatprep.subr.bf16.mxu0 %v292
    %336 = vmatpush1.bf16.msra.mxu0 %v291
    %337 = vmatprep.subr.bf16.mxu0 %v294
    %338 = vmatpush1.bf16.msra.mxu0 %v293
    %339 = vmatprep.subr.bf16.mxu0 %v296
    %340 = vmatpush1.bf16.msra.mxu0 %v295
    %341 = vmatprep.mubr.bf16.mxu0 %v260
    %342 = vmatmul.mubr.bf16.gmra.mrb[0].mxu0 %v259
    %v343 = vpop.f32.mrb[0].mxu0
    %v344 = vadd.f32 %v302, %v343
    %v345 = vpop.f32.mrb[0].mxu0
    %v346 = vadd.f32 %v306, %v345
    %v347 = vpop.f32.mrb[0].mxu0
    %v348 = vpop.f32.mrb[0].mxu0
    %349 = vdwg.mxu0
    %v350 = vmax.f32 %v344, 0.0
    %v351 = vmax.f32 %v346, 0.0
    %v352 = vpack.c.bf16 %v350, %v350
    %v353 = vpack.c.bf16 %v351, %v351
    %s354 = sshll.u32 %s262, 4
    %355 = dma.done %s74, %s354
    %v356 = vld [vmem:[%s73] sm:$0xff]
    %v357 = vld [vmem:[%s73 + $0x8] sm:$0xff]
    %v358 = vld [vmem:[%s73 + $0x10] sm:$0xff]
    %v359 = vld [vmem:[%s73 + $0x18] sm:$0xff]
    %v360 = vld [vmem:[%s73 + $0x20] sm:$0xff]
    %v361 = vld [vmem:[%s73 + $0x28] sm:$0xff]
    %v362 = vld [vmem:[%s73 + $0x30] sm:$0xff]
    %v363 = vld [vmem:[%s73 + $0x38] sm:$0xff]
    %v364 = vld [vmem:[%s73 + $0x40] sm:$0xff]
    %v365 = vld [vmem:[%s73 + $0x48] sm:$0xff]
    %v366 = vld [vmem:[%s73 + $0x50] sm:$0xff]
    %v367 = vld [vmem:[%s73 + $0x58] sm:$0xff]
    %v368 = vld [vmem:[%s73 + $0x60] sm:$0xff]
    %v369 = vld [vmem:[%s73 + $0x68] sm:$0xff]
    %v370 = vld [vmem:[%s73 + $0x70] sm:$0xff]
    %v371 = vld [vmem:[%s73 + $0x78] sm:$0xff]
    %v372 = vld [vmem:[%s73 + $0x80] sm:$0xff]
    %v373 = vld [vmem:[%s73 + $0x88] sm:$0xff]
    %v374 = vld [vmem:[%s73 + $0x90] sm:$0xff]
    %v375 = vld [vmem:[%s73 + $0x98] sm:$0xff]
    %v376 = vld [vmem:[%s73 + $0xa0] sm:$0xff]
    %v377 = vld [vmem:[%s73 + $0xa8] sm:$0xff]
    %v378 = vld [vmem:[%s73 + $0xb0] sm:$0xff]
    %v379 = vld [vmem:[%s73 + $0xb8] sm:$0xff]
    %v380 = vld [vmem:[%s73 + $0xc0] sm:$0xff]
    %v381 = vld [vmem:[%s73 + $0xc8] sm:$0xff]
    %v382 = vld [vmem:[%s73 + $0xd0] sm:$0xff]
    %v383 = vld [vmem:[%s73 + $0xd8] sm:$0xff]
    %v384 = vld [vmem:[%s73 + $0xe0] sm:$0xff]
    %v385 = vld [vmem:[%s73 + $0xe8] sm:$0xff]
    %v386 = vld [vmem:[%s73 + $0xf0] sm:$0xff]
    %v387 = vld [vmem:[%s73 + $0xf8] sm:$0xff]
    %s388 = scalar_lea.vmem [#allocation7], 1
    %v389 = vld [vmem:[%s388] ss:$8 sm:$0x3]
    %v391 = vlaneseq
    %v392 = vshrl.u32 %v391, 7
    %v393 = vsub.s32 0, %v392
    %v394 = vrot.slane %v389, %v393
    %v395 = vlaneseq
    %v396 = vshrl.u32 %v395, 7
    %v397 = vsub.s32 1, %v396
    %v398 = vrot.slane %v389, %v397
    %401 = vmatprep.subr.bf16.mxu0 %v357
    %402 = vmatpush1.bf16.msra.mxu0 %v356
    %403 = vmatprep.subr.bf16.mxu0 %v359
    %404 = vmatpush1.bf16.msra.mxu0 %v358
    %405 = vmatprep.subr.bf16.mxu0 %v361
    %406 = vmatpush1.bf16.msra.mxu0 %v360
    %407 = vmatprep.subr.bf16.mxu0 %v363
    %408 = vmatpush1.bf16.msra.mxu0 %v362
    %409 = vmatprep.subr.bf16.mxu0 %v365
    %410 = vmatpush1.bf16.msra.mxu0 %v364
    %411 = vmatprep.subr.bf16.mxu0 %v367
    %412 = vmatpush1.bf16.msra.mxu0 %v366
    %413 = vmatprep.subr.bf16.mxu0 %v369
    %414 = vmatpush1.bf16.msra.mxu0 %v368
    %415 = vmatprep.subr.bf16.mxu0 %v371
    %416 = vmatpush1.bf16.msra.mxu0 %v370
    %417 = vmatprep.subr.bf16.mxu0 %v373
    %418 = vmatpush1.bf16.msra.mxu0 %v372
    %419 = vmatprep.subr.bf16.mxu0 %v375
    %420 = vmatpush1.bf16.msra.mxu0 %v374
    %421 = vmatprep.subr.bf16.mxu0 %v377
    %422 = vmatpush1.bf16.msra.mxu0 %v376
    %423 = vmatprep.subr.bf16.mxu0 %v379
    %424 = vmatpush1.bf16.msra.mxu0 %v378
    %425 = vmatprep.subr.bf16.mxu0 %v381
    %426 = vmatpush1.bf16.msra.mxu0 %v380
    %427 = vmatprep.subr.bf16.mxu0 %v383
    %428 = vmatpush1.bf16.msra.mxu0 %v382
    %429 = vmatprep.subr.bf16.mxu0 %v385
    %430 = vmatpush1.bf16.msra.mxu0 %v384
    %431 = vmatprep.subr.bf16.mxu0 %v387
    %432 = vmatpush1.bf16.msra.mxu0 %v386
    %433 = vmatprep.mubr.bf16.mxu0 %v353
    %434 = vmatmul.mubr.bf16.gmra.mrb[0].mxu0 %v352
    %v435 = vpop.f32.mrb[0].mxu0
    %v436 = vadd.f32 %v394, %v435
    %v437 = vpop.f32.mrb[0].mxu0
    %v438 = vadd.f32 %v398, %v437
    %v439 = vpop.f32.mrb[0].mxu0
    %v440 = vpop.f32.mrb[0].mxu0
    %441 = vdwg.mxu0
    %v442 = vmax.f32 %v436, 0.0
    %v443 = vmax.f32 %v438, 0.0
    %v444 = vpack.c.bf16 %v442, %v442
    %v445 = vpack.c.bf16 %v443, %v443
    %s446 = sshll.u32 %s262, 4
    %447 = dma.done %s111, %s446
    %v448 = vld [vmem:[%s110] sm:$0xff]
    %v449 = vld [vmem:[%s110 + $0x8] sm:$0xff]
    %v450 = vld [vmem:[%s110 + $0x10] sm:$0xff]
    %v451 = vld [vmem:[%s110 + $0x18] sm:$0xff]
    %v452 = vld [vmem:[%s110 + $0x20] sm:$0xff]
    %v453 = vld [vmem:[%s110 + $0x28] sm:$0xff]
    %v454 = vld [vmem:[%s110 + $0x30] sm:$0xff]
    %v455 = vld [vmem:[%s110 + $0x38] sm:$0xff]
    %v456 = vld [vmem:[%s110 + $0x40] sm:$0xff]
    %v457 = vld [vmem:[%s110 + $0x48] sm:$0xff]
    %v458 = vld [vmem:[%s110 + $0x50] sm:$0xff]
    %v459 = vld [vmem:[%s110 + $0x58] sm:$0xff]
    %v460 = vld [vmem:[%s110 + $0x60] sm:$0xff]
    %v461 = vld [vmem:[%s110 + $0x68] sm:$0xff]
    %v462 = vld [vmem:[%s110 + $0x70] sm:$0xff]
    %v463 = vld [vmem:[%s110 + $0x78] sm:$0xff]
    %v464 = vld [vmem:[%s110 + $0x80] sm:$0xff]
    %v465 = vld [vmem:[%s110 + $0x88] sm:$0xff]
    %v466 = vld [vmem:[%s110 + $0x90] sm:$0xff]
    %v467 = vld [vmem:[%s110 + $0x98] sm:$0xff]
    %v468 = vld [vmem:[%s110 + $0xa0] sm:$0xff]
    %v469 = vld [vmem:[%s110 + $0xa8] sm:$0xff]
    %v470 = vld [vmem:[%s110 + $0xb0] sm:$0xff]
    %v471 = vld [vmem:[%s110 + $0xb8] sm:$0xff]
    %v472 = vld [vmem:[%s110 + $0xc0] sm:$0xff]
    %v473 = vld [vmem:[%s110 + $0xc8] sm:$0xff]
    %v474 = vld [vmem:[%s110 + $0xd0] sm:$0xff]
    %v475 = vld [vmem:[%s110 + $0xd8] sm:$0xff]
    %v476 = vld [vmem:[%s110 + $0xe0] sm:$0xff]
    %v477 = vld [vmem:[%s110 + $0xe8] sm:$0xff]
    %v478 = vld [vmem:[%s110 + $0xf0] sm:$0xff]
    %v479 = vld [vmem:[%s110 + $0xf8] sm:$0xff]
    %s480 = scalar_lea.vmem [#allocation7], 2
    %v481 = vld [vmem:[%s480] ss:$8 sm:$0x3]
    %v483 = vlaneseq
    %v484 = vshrl.u32 %v483, 7
    %v485 = vsub.s32 0, %v484
    %v486 = vrot.slane %v481, %v485
    %v487 = vlaneseq
    %v488 = vshrl.u32 %v487, 7
    %v489 = vsub.s32 1, %v488
    %v490 = vrot.slane %v481, %v489
    %493 = vmatprep.subr.bf16.mxu0 %v449
    %494 = vmatpush1.bf16.msra.mxu0 %v448
    %495 = vmatprep.subr.bf16.mxu0 %v451
    %496 = vmatpush1.bf16.msra.mxu0 %v450
    %497 = vmatprep.subr.bf16.mxu0 %v453
    %498 = vmatpush1.bf16.msra.mxu0 %v452
    %499 = vmatprep.subr.bf16.mxu0 %v455
    %500 = vmatpush1.bf16.msra.mxu0 %v454
    %501 = vmatprep.subr.bf16.mxu0 %v457
    %502 = vmatpush1.bf16.msra.mxu0 %v456
    %503 = vmatprep.subr.bf16.mxu0 %v459
    %504 = vmatpush1.bf16.msra.mxu0 %v458
    %505 = vmatprep.subr.bf16.mxu0 %v461
    %506 = vmatpush1.bf16.msra.mxu0 %v460
    %507 = vmatprep.subr.bf16.mxu0 %v463
    %508 = vmatpush1.bf16.msra.mxu0 %v462
    %509 = vmatprep.subr.bf16.mxu0 %v465
    %510 = vmatpush1.bf16.msra.mxu0 %v464
    %511 = vmatprep.subr.bf16.mxu0 %v467
    %512 = vmatpush1.bf16.msra.mxu0 %v466
    %513 = vmatprep.subr.bf16.mxu0 %v469
    %514 = vmatpush1.bf16.msra.mxu0 %v468
    %515 = vmatprep.subr.bf16.mxu0 %v471
    %516 = vmatpush1.bf16.msra.mxu0 %v470
    %517 = vmatprep.subr.bf16.mxu0 %v473
    %518 = vmatpush1.bf16.msra.mxu0 %v472
    %519 = vmatprep.subr.bf16.mxu0 %v475
    %520 = vmatpush1.bf16.msra.mxu0 %v474
    %521 = vmatprep.subr.bf16.mxu0 %v477
    %522 = vmatpush1.bf16.msra.mxu0 %v476
    %523 = vmatprep.subr.bf16.mxu0 %v479
    %524 = vmatpush1.bf16.msra.mxu0 %v478
    %525 = vmatprep.mubr.bf16.mxu0 %v445
    %526 = vmatmul.mubr.bf16.gmra.mrb[0].mxu0 %v444
    %v527 = vpop.f32.mrb[0].mxu0
    %v528 = vadd.f32 %v486, %v527
    %v529 = vpop.f32.mrb[0].mxu0
    %v530 = vadd.f32 %v490, %v529
    %v531 = vpop.f32.mrb[0].mxu0
    %v532 = vpop.f32.mrb[0].mxu0
    %533 = vdwg.mxu0
    %v534 = vmax.f32 %v528, 0.0
    %v535 = vmax.f32 %v530, 0.0
    %v536 = vpack.c.bf16 %v534, %v534
    %v537 = vpack.c.bf16 %v535, %v535
    %s538 = sshll.u32 %s262, 4
    %539 = dma.done %s148, %s538
    %v540 = vld [vmem:[%s147] sm:$0xff]
    %v541 = vld [vmem:[%s147 + $0x8] sm:$0xff]
    %v542 = vld [vmem:[%s147 + $0x10] sm:$0xff]
    %v543 = vld [vmem:[%s147 + $0x18] sm:$0xff]
    %v544 = vld [vmem:[%s147 + $0x20] sm:$0xff]
    %v545 = vld [vmem:[%s147 + $0x28] sm:$0xff]
    %v546 = vld [vmem:[%s147 + $0x30] sm:$0xff]
    %v547 = vld [vmem:[%s147 + $0x38] sm:$0xff]
    %v548 = vld [vmem:[%s147 + $0x40] sm:$0xff]
    %v549 = vld [vmem:[%s147 + $0x48] sm:$0xff]
    %v550 = vld [vmem:[%s147 + $0x50] sm:$0xff]
    %v551 = vld [vmem:[%s147 + $0x58] sm:$0xff]
    %v552 = vld [vmem:[%s147 + $0x60] sm:$0xff]
    %v553 = vld [vmem:[%s147 + $0x68] sm:$0xff]
    %v554 = vld [vmem:[%s147 + $0x70] sm:$0xff]
    %v555 = vld [vmem:[%s147 + $0x78] sm:$0xff]
    %v556 = vld [vmem:[%s147 + $0x80] sm:$0xff]
    %v557 = vld [vmem:[%s147 + $0x88] sm:$0xff]
    %v558 = vld [vmem:[%s147 + $0x90] sm:$0xff]
    %v559 = vld [vmem:[%s147 + $0x98] sm:$0xff]
    %v560 = vld [vmem:[%s147 + $0xa0] sm:$0xff]
    %v561 = vld [vmem:[%s147 + $0xa8] sm:$0xff]
    %v562 = vld [vmem:[%s147 + $0xb0] sm:$0xff]
    %v563 = vld [vmem:[%s147 + $0xb8] sm:$0xff]
    %v564 = vld [vmem:[%s147 + $0xc0] sm:$0xff]
    %v565 = vld [vmem:[%s147 + $0xc8] sm:$0xff]
    %v566 = vld [vmem:[%s147 + $0xd0] sm:$0xff]
    %v567 = vld [vmem:[%s147 + $0xd8] sm:$0xff]
    %v568 = vld [vmem:[%s147 + $0xe0] sm:$0xff]
    %v569 = vld [vmem:[%s147 + $0xe8] sm:$0xff]
    %v570 = vld [vmem:[%s147 + $0xf0] sm:$0xff]
    %v571 = vld [vmem:[%s147 + $0xf8] sm:$0xff]
    %s572 = scalar_lea.vmem [#allocation7], 3
    %v573 = vld [vmem:[%s572] ss:$8 sm:$0x3]
    %v575 = vlaneseq
    %v576 = vshrl.u32 %v575, 7
    %v577 = vsub.s32 0, %v576
    %v578 = vrot.slane %v573, %v577
    %v579 = vlaneseq
    %v580 = vshrl.u32 %v579, 7
    %v581 = vsub.s32 1, %v580
    %v582 = vrot.slane %v573, %v581
    %585 = vmatprep.subr.bf16.mxu0 %v541
    %586 = vmatpush1.bf16.msra.mxu0 %v540
    %587 = vmatprep.subr.bf16.mxu0 %v543
    %588 = vmatpush1.bf16.msra.mxu0 %v542
    %589 = vmatprep.subr.bf16.mxu0 %v545
    %590 = vmatpush1.bf16.msra.mxu0 %v544
    %591 = vmatprep.subr.bf16.mxu0 %v547
    %592 = vmatpush1.bf16.msra.mxu0 %v546
    %593 = vmatprep.subr.bf16.mxu0 %v549
    %594 = vmatpush1.bf16.msra.mxu0 %v548
    %595 = vmatprep.subr.bf16.mxu0 %v551
    %596 = vmatpush1.bf16.msra.mxu0 %v550
    %597 = vmatprep.subr.bf16.mxu0 %v553
    %598 = vmatpush1.bf16.msra.mxu0 %v552
    %599 = vmatprep.subr.bf16.mxu0 %v555
    %600 = vmatpush1.bf16.msra.mxu0 %v554
    %601 = vmatprep.subr.bf16.mxu0 %v557
    %602 = vmatpush1.bf16.msra.mxu0 %v556
    %603 = vmatprep.subr.bf16.mxu0 %v559
    %604 = vmatpush1.bf16.msra.mxu0 %v558
    %605 = vmatprep.subr.bf16.mxu0 %v561
    %606 = vmatpush1.bf16.msra.mxu0 %v560
    %607 = vmatprep.subr.bf16.mxu0 %v563
    %608 = vmatpush1.bf16.msra.mxu0 %v562
    %609 = vmatprep.subr.bf16.mxu0 %v565
    %610 = vmatpush1.bf16.msra.mxu0 %v564
    %611 = vmatprep.subr.bf16.mxu0 %v567
    %612 = vmatpush1.bf16.msra.mxu0 %v566
    %613 = vmatprep.subr.bf16.mxu0 %v569
    %614 = vmatpush1.bf16.msra.mxu0 %v568
    %615 = vmatprep.subr.bf16.mxu0 %v571
    %616 = vmatpush1.bf16.msra.mxu0 %v570
    %617 = vmatprep.mubr.bf16.mxu0 %v537
    %618 = vmatmul.mubr.bf16.gmra.mrb[0].mxu0 %v536
    %v619 = vpop.f32.mrb[0].mxu0
    %v620 = vadd.f32 %v578, %v619
    %v621 = vpop.f32.mrb[0].mxu0
    %v622 = vadd.f32 %v582, %v621
    %v623 = vpop.f32.mrb[0].mxu0
    %v624 = vpop.f32.mrb[0].mxu0
    %625 = vdwg.mxu0
    %v626 = vmax.f32 %v620, 0.0
    %v627 = vmax.f32 %v622, 0.0
    %v628 = vpack.c.bf16 %v626, %v626
    %v629 = vpack.c.bf16 %v627, %v627
    %s630 = sshll.u32 %s262, 4
    %631 = dma.done %s185, %s630
    %v632 = vld [vmem:[%s184] sm:$0xff]
    %v633 = vld [vmem:[%s184 + $0x8] sm:$0xff]
    %v634 = vld [vmem:[%s184 + $0x10] sm:$0xff]
    %v635 = vld [vmem:[%s184 + $0x18] sm:$0xff]
    %v636 = vld [vmem:[%s184 + $0x20] sm:$0xff]
    %v637 = vld [vmem:[%s184 + $0x28] sm:$0xff]
    %v638 = vld [vmem:[%s184 + $0x30] sm:$0xff]
    %v639 = vld [vmem:[%s184 + $0x38] sm:$0xff]
    %v640 = vld [vmem:[%s184 + $0x40] sm:$0xff]
    %v641 = vld [vmem:[%s184 + $0x48] sm:$0xff]
    %v642 = vld [vmem:[%s184 + $0x50] sm:$0xff]
    %v643 = vld [vmem:[%s184 + $0x58] sm:$0xff]
    %v644 = vld [vmem:[%s184 + $0x60] sm:$0xff]
    %v645 = vld [vmem:[%s184 + $0x68] sm:$0xff]
    %v646 = vld [vmem:[%s184 + $0x70] sm:$0xff]
    %v647 = vld [vmem:[%s184 + $0x78] sm:$0xff]
    %v648 = vld [vmem:[%s184 + $0x80] sm:$0xff]
    %v649 = vld [vmem:[%s184 + $0x88] sm:$0xff]
    %v650 = vld [vmem:[%s184 + $0x90] sm:$0xff]
    %v651 = vld [vmem:[%s184 + $0x98] sm:$0xff]
    %v652 = vld [vmem:[%s184 + $0xa0] sm:$0xff]
    %v653 = vld [vmem:[%s184 + $0xa8] sm:$0xff]
    %v654 = vld [vmem:[%s184 + $0xb0] sm:$0xff]
    %v655 = vld [vmem:[%s184 + $0xb8] sm:$0xff]
    %v656 = vld [vmem:[%s184 + $0xc0] sm:$0xff]
    %v657 = vld [vmem:[%s184 + $0xc8] sm:$0xff]
    %v658 = vld [vmem:[%s184 + $0xd0] sm:$0xff]
    %v659 = vld [vmem:[%s184 + $0xd8] sm:$0xff]
    %v660 = vld [vmem:[%s184 + $0xe0] sm:$0xff]
    %v661 = vld [vmem:[%s184 + $0xe8] sm:$0xff]
    %v662 = vld [vmem:[%s184 + $0xf0] sm:$0xff]
    %v663 = vld [vmem:[%s184 + $0xf8] sm:$0xff]
    %s664 = scalar_lea.vmem [#allocation7], 4
    %v665 = vld [vmem:[%s664] ss:$8 sm:$0x3]
    %v667 = vlaneseq
    %v668 = vshrl.u32 %v667, 7
    %v669 = vsub.s32 0, %v668
    %v670 = vrot.slane %v665, %v669
    %v671 = vlaneseq
    %v672 = vshrl.u32 %v671, 7
    %v673 = vsub.s32 1, %v672
    %v674 = vrot.slane %v665, %v673
    %677 = vmatprep.subr.bf16.mxu0 %v633
    %678 = vmatpush1.bf16.msra.mxu0 %v632
    %679 = vmatprep.subr.bf16.mxu0 %v635
    %680 = vmatpush1.bf16.msra.mxu0 %v634
    %681 = vmatprep.subr.bf16.mxu0 %v637
    %682 = vmatpush1.bf16.msra.mxu0 %v636
    %683 = vmatprep.subr.bf16.mxu0 %v639
    %684 = vmatpush1.bf16.msra.mxu0 %v638
    %685 = vmatprep.subr.bf16.mxu0 %v641
    %686 = vmatpush1.bf16.msra.mxu0 %v640
    %687 = vmatprep.subr.bf16.mxu0 %v643
    %688 = vmatpush1.bf16.msra.mxu0 %v642
    %689 = vmatprep.subr.bf16.mxu0 %v645
    %690 = vmatpush1.bf16.msra.mxu0 %v644
    %691 = vmatprep.subr.bf16.mxu0 %v647
    %692 = vmatpush1.bf16.msra.mxu0 %v646
    %693 = vmatprep.subr.bf16.mxu0 %v649
    %694 = vmatpush1.bf16.msra.mxu0 %v648
    %695 = vmatprep.subr.bf16.mxu0 %v651
    %696 = vmatpush1.bf16.msra.mxu0 %v650
    %697 = vmatprep.subr.bf16.mxu0 %v653
    %698 = vmatpush1.bf16.msra.mxu0 %v652
    %699 = vmatprep.subr.bf16.mxu0 %v655
    %700 = vmatpush1.bf16.msra.mxu0 %v654
    %701 = vmatprep.subr.bf16.mxu0 %v657
    %702 = vmatpush1.bf16.msra.mxu0 %v656
    %703 = vmatprep.subr.bf16.mxu0 %v659
    %704 = vmatpush1.bf16.msra.mxu0 %v658
    %705 = vmatprep.subr.bf16.mxu0 %v661
    %706 = vmatpush1.bf16.msra.mxu0 %v660
    %707 = vmatprep.subr.bf16.mxu0 %v663
    %708 = vmatpush1.bf16.msra.mxu0 %v662
    %709 = vmatprep.mubr.bf16.mxu0 %v629
    %710 = vmatmul.mubr.bf16.gmra.mrb[0].mxu0 %v628
    %v711 = vpop.f32.mrb[0].mxu0
    %v712 = vadd.f32 %v670, %v711
    %v713 = vpop.f32.mrb[0].mxu0
    %v714 = vadd.f32 %v674, %v713
    %v715 = vpop.f32.mrb[0].mxu0
    %v716 = vpop.f32.mrb[0].mxu0
    %717 = vdwg.mxu0
    %v718 = vmax.f32 %v712, 0.0
    %v719 = vmax.f32 %v714, 0.0
    %v720 = vpack.c.bf16 %v718, %v718
    %v721 = vpack.c.bf16 %v719, %v719
    %s722 = sshll.u32 %s262, 4
    %723 = dma.done %s222, %s722
    %v724 = vld [vmem:[%s221] sm:$0xff]
    %v725 = vld [vmem:[%s221 + $0x8] sm:$0xff]
    %v726 = vld [vmem:[%s221 + $0x10] sm:$0xff]
    %v727 = vld [vmem:[%s221 + $0x18] sm:$0xff]
    %v728 = vld [vmem:[%s221 + $0x20] sm:$0xff]
    %v729 = vld [vmem:[%s221 + $0x28] sm:$0xff]
    %v730 = vld [vmem:[%s221 + $0x30] sm:$0xff]
    %v731 = vld [vmem:[%s221 + $0x38] sm:$0xff]
    %v732 = vld [vmem:[%s221 + $0x40] sm:$0xff]
    %v733 = vld [vmem:[%s221 + $0x48] sm:$0xff]
    %v734 = vld [vmem:[%s221 + $0x50] sm:$0xff]
    %v735 = vld [vmem:[%s221 + $0x58] sm:$0xff]
    %v736 = vld [vmem:[%s221 + $0x60] sm:$0xff]
    %v737 = vld [vmem:[%s221 + $0x68] sm:$0xff]
    %v738 = vld [vmem:[%s221 + $0x70] sm:$0xff]
    %v739 = vld [vmem:[%s221 + $0x78] sm:$0xff]
    %v740 = vld [vmem:[%s221 + $0x80] sm:$0xff]
    %v741 = vld [vmem:[%s221 + $0x88] sm:$0xff]
    %v742 = vld [vmem:[%s221 + $0x90] sm:$0xff]
    %v743 = vld [vmem:[%s221 + $0x98] sm:$0xff]
    %v744 = vld [vmem:[%s221 + $0xa0] sm:$0xff]
    %v745 = vld [vmem:[%s221 + $0xa8] sm:$0xff]
    %v746 = vld [vmem:[%s221 + $0xb0] sm:$0xff]
    %v747 = vld [vmem:[%s221 + $0xb8] sm:$0xff]
    %v748 = vld [vmem:[%s221 + $0xc0] sm:$0xff]
    %v749 = vld [vmem:[%s221 + $0xc8] sm:$0xff]
    %v750 = vld [vmem:[%s221 + $0xd0] sm:$0xff]
    %v751 = vld [vmem:[%s221 + $0xd8] sm:$0xff]
    %v752 = vld [vmem:[%s221 + $0xe0] sm:$0xff]
    %v753 = vld [vmem:[%s221 + $0xe8] sm:$0xff]
    %v754 = vld [vmem:[%s221 + $0xf0] sm:$0xff]
    %v755 = vld [vmem:[%s221 + $0xf8] sm:$0xff]
    %s756 = scalar_lea.vmem [#allocation7], 5
    %v757 = vld [vmem:[%s756] ss:$8 sm:$0x3]
    %v759 = vlaneseq
    %v760 = vshrl.u32 %v759, 7
    %v761 = vsub.s32 0, %v760
    %v762 = vrot.slane %v757, %v761
    %v763 = vlaneseq
    %v764 = vshrl.u32 %v763, 7
    %v765 = vsub.s32 1, %v764
    %v766 = vrot.slane %v757, %v765
    %769 = vmatprep.subr.bf16.mxu0 %v725
    %770 = vmatpush1.bf16.msra.mxu0 %v724
    %771 = vmatprep.subr.bf16.mxu0 %v727
    %772 = vmatpush1.bf16.msra.mxu0 %v726
    %773 = vmatprep.subr.bf16.mxu0 %v729
    %774 = vmatpush1.bf16.msra.mxu0 %v728
    %775 = vmatprep.subr.bf16.mxu0 %v731
    %776 = vmatpush1.bf16.msra.mxu0 %v730
    %777 = vmatprep.subr.bf16.mxu0 %v733
    %778 = vmatpush1.bf16.msra.mxu0 %v732
    %779 = vmatprep.subr.bf16.mxu0 %v735
    %780 = vmatpush1.bf16.msra.mxu0 %v734
    %781 = vmatprep.subr.bf16.mxu0 %v737
    %782 = vmatpush1.bf16.msra.mxu0 %v736
    %783 = vmatprep.subr.bf16.mxu0 %v739
    %784 = vmatpush1.bf16.msra.mxu0 %v738
    %785 = vmatprep.subr.bf16.mxu0 %v741
    %786 = vmatpush1.bf16.msra.mxu0 %v740
    %787 = vmatprep.subr.bf16.mxu0 %v743
    %788 = vmatpush1.bf16.msra.mxu0 %v742
    %789 = vmatprep.subr.bf16.mxu0 %v745
    %790 = vmatpush1.bf16.msra.mxu0 %v744
    %791 = vmatprep.subr.bf16.mxu0 %v747
    %792 = vmatpush1.bf16.msra.mxu0 %v746
    %793 = vmatprep.subr.bf16.mxu0 %v749
    %794 = vmatpush1.bf16.msra.mxu0 %v748
    %795 = vmatprep.subr.bf16.mxu0 %v751
    %796 = vmatpush1.bf16.msra.mxu0 %v750
    %797 = vmatprep.subr.bf16.mxu0 %v753
    %798 = vmatpush1.bf16.msra.mxu0 %v752
    %799 = vmatprep.subr.bf16.mxu0 %v755
    %800 = vmatpush1.bf16.msra.mxu0 %v754
    %801 = vmatprep.mubr.bf16.mxu0 %v721
    %802 = vmatmul.mubr.bf16.gmra.mrb[0].mxu0 %v720
    %v803 = vpop.f32.mrb[0].mxu0
    %v804 = vadd.f32 %v762, %v803
    %v805 = vpop.f32.mrb[0].mxu0
    %v806 = vadd.f32 %v766, %v805
    %v807 = vpop.f32.mrb[0].mxu0
    %v808 = vpop.f32.mrb[0].mxu0
    %809 = vdwg.mxu0
    %810 = vst [vmem:[#allocation9] sm:$0xff] %v804
    %811 = vst [vmem:[#allocation9 + $0x8] sm:$0xff] %v806
    // Predicated region
    $region18: #{tpu_custom_call.1} parent=1 // pred_check
      _
    $region19: #{tpu_custom_call.1} parent=1 // pred_check_branch
      %813 = sbr.rel (0) target = $region21
    $region20: #{tpu_custom_call.1} parent=1 // pred_region
      %s815 = ssub.s32 256, 256
      %816 = vsyncadd [#allocation6], %s815
      %s818 = sshll.u32 [#allocation9], 4
      %s819 = int_to_ptr.vmem [resolvable:$true] %s818
      %821 = dma.vmem_to_hbm [thread:$0]  %s819, 256, %s3, [#allocation6]
    $region21: #{tpu_custom_call.1} parent=1 // pred_fallthru
      _
    // Predicated region
    $region22: #{tpu_custom_call.1} parent=1 // pred_check
      _
    $region23: #{tpu_custom_call.1} parent=1 // pred_check_branch
      %823 = sbr.rel (0) target = $region25
    $region24: #{tpu_custom_call.1} parent=1 // pred_region
      %824 = dma.done [#allocation6], 256
    $region25: #{tpu_custom_call.1} parent=1 // pred_fallthru
      _
    %825 = vsyncpa [#allocation5], 1
    %826 = vsyncpa [#allocation8], 1
    %827 = vsyncpa [#allocation6], 1
  %828 = vsyncmov [#allocation3]
  %s829 = vpop.sfrf %828
  %p830 = scmp.eq.s32.totalorder %s829, 0
  %p831 = pneg %p830
  %833 = shalt.err (%p831)
  %s834 = scalar_lea.sflag [#allocation3], 1
  %835 = vsyncmov %s834
  %s836 = vpop.sfrf %835
  %p837 = scmp.eq.s32.totalorder %s836, 0
  %p838 = pneg %p837
  %840 = shalt.err (%p838)
  %s841 = scalar_lea.sflag [#allocation3], 2
  %842 = vsyncmov %s841
  %s843 = vpop.sfrf %842
  %p844 = scmp.eq.s32.totalorder %s843, 0
  %p845 = pneg %p844
  %847 = shalt.err (%p845)
  %s848 = scalar_lea.sflag [#allocation3], 3
  %849 = vsyncmov %s848
  %s850 = vpop.sfrf %849
  %p851 = scmp.eq.s32.totalorder %s850, 0
  %p852 = pneg %p851
  %854 = shalt.err (%p852)
  %s855 = scalar_lea.sflag [#allocation3], 4
  %856 = vsyncmov %s855
  %s857 = vpop.sfrf %856
  %p858 = scmp.eq.s32.totalorder %s857, 0
  %p859 = pneg %p858
  %861 = shalt.err (%p859)
  %s862 = scalar_lea.sflag [#allocation3], 5
  %863 = vsyncmov %s862
  %s864 = vpop.sfrf %863
  %p865 = scmp.eq.s32.totalorder %s864, 0
  %p866 = pneg %p865
  %868 = shalt.err (%p866)

</llo_original>
